<compile_context>
chip_gen: v7x
topology: tpu7x:2x2x1
jax: 0.10.0
libtpu: 0.0.40
codegen_flags: <defaults>
</compile_context>

<pallas_src>
import jax
import jax.numpy as jnp
from jax import lax
from jax.experimental import pallas as pl
from jax.experimental.pallas import tpu as pltpu


def _round_up(n: int, m: int) -> int:
    return ((n + m - 1) // m) * m


def _pick_tk(f_pad: int, target: int = 2048) -> int:
    """Largest multiple of 128 that divides f_pad and is <= target."""
    best = 128
    t = 128
    upper = min(f_pad, target)
    while t <= upper:
        if f_pad % t == 0:
            best = t
        t += 128
    return best


# Conservative VMEM budget for keeping (weight + prototypes) resident,
# safe across v5e/v6e (128 MiB) and v7x (64 MiB physical per core).
_WEIGHT_RESIDENT_BUDGET = 20 * 1024 * 1024


def _make_hsp_kernel(resident: bool, tk: int):
    """Fused backbone-linear (tiled over F) + L2 normalize + prototype matmul.

    Grid: (B_pad // TM, F_pad // TK); axis 1 is the reduction over F.

    x_ref  : (TM, TK)                       bf16  input tile
    w_ref  : (F_pad, D_pad) or (TK, D_pad)  bf16  backbone weight (resident / streamed)
    b_ref  : (1, D_pad)                     f32   backbone bias (zero-padded)
    pt_ref : (D_pad, C_pad)                 bf16  polars.T (zero-padded)
    o_ref  : (TM, C_pad)                    f32   output logits tile
    acc_ref: (TM, D_pad)                    f32   accumulator, resident across k
    """

    def kernel(x_ref, w_ref, b_ref, pt_ref, o_ref, acc_ref):
        k = pl.program_id(1)

        @pl.when(k == 0)
        def _init():
            # Bias-initialize the accumulator: removes the epilogue bias add.
            acc_ref[...] = jnp.broadcast_to(b_ref[...], acc_ref.shape)

        if resident:
            # Whole weight lives in VMEM (DMA'd once); slice the k-th tile.
            off = pl.multiple_of(k * tk, 128)
            w_tile = w_ref[pl.ds(off, tk), :]
        else:
            w_tile = w_ref[...]

        # Pure MXU accumulate over the F reduction (bf16 x bf16 -> f32 acc).
        acc_ref[...] += jnp.dot(x_ref[...], w_tile,
                                preferred_element_type=jnp.float32)

        @pl.when(k == pl.num_programs(1) - 1)
        def _epilogue():
            feat = acc_ref[...]
            # torch F.normalize(x, p=2, dim=1): x / max(||x||, eps).
            sq = jnp.sum(feat * feat, axis=1, keepdims=True)
            inv = lax.rsqrt(jnp.maximum(sq, 1e-24))       # EUP
            logits = jnp.dot(feat.astype(pt_ref.dtype), pt_ref[...],
                             preferred_element_type=jnp.float32)
            # Row scaling commutes with the right-matmul: apply on the small
            # (TM, C_pad) tile instead of (TM, D_pad).
            o_ref[...] = logits * inv

    return kernel


def prepare_hsp_params(w, b, polars):
    """One-time parameter prep (transpose + pad + bf16 cast), fully hoisted
    out of the per-call forward path (including the F padding).

    w      : (D, F)  backbone Linear weight (PyTorch layout: out, in)
    b      : (D,)    backbone Linear bias
    polars : (C, D)  prototype matrix
    """
    D, F = w.shape
    C = polars.shape[0]
    D_pad = _round_up(D, 128)
    C_pad = _round_up(C, 128)
    F_pad = _round_up(F, 128)

    w_t = jnp.zeros((F_pad, D_pad), jnp.bfloat16).at[:F, :D].set(
        jnp.asarray(w, jnp.float32).T.astype(jnp.bfloat16))
    b2 = jnp.zeros((1, D_pad), jnp.float32).at[0, :D].set(
        jnp.asarray(b, jnp.float32))
    pt = jnp.zeros((D_pad, C_pad), jnp.bfloat16).at[:D, :C].set(
        jnp.asarray(polars, jnp.float32).T.astype(jnp.bfloat16))

    return {"w_t": w_t, "b2": b2, "pt": pt,
            "F": F, "D": D, "C": C,
            "F_pad": F_pad, "D_pad": D_pad, "C_pad": C_pad}


def hyperspherical_prototype_forward(x_nchw, params):
    """Forward pass: flatten NCHW input and run the fused Pallas kernel.

    x_nchw : (B, C_in, H, W) float32
    params : output of prepare_hsp_params
    returns: (B, num_classes) float32 logits
    """
    B = x_nchw.shape[0]
    x_flat = jnp.asarray(x_nchw, jnp.float32).reshape(B, -1)      # (B, F)
    F = x_flat.shape[1]
    assert F == params["F"], "input feature size mismatch with backbone weight"

    F_pad = params["F_pad"]
    D_pad = params["D_pad"]
    C_pad = params["C_pad"]
    C = params["C"]

    # ----- batch tile ------------------------------------------------------
    if B >= 512:
        TM = 256               # fills the 256-wide MXU M dim on v6e/v7x
    elif B >= 128:
        TM = 128
    else:
        TM = _round_up(B, 8)
    B_pad = _round_up(B, TM)
    # Guarantee >= 2 batch-axis steps when possible so the "parallel" axis
    # can shard across both v7x TensorCores.
    if B_pad // TM == 1 and TM >= 16:
        TM = _round_up(TM // 2, 8)
        B_pad = _round_up(B, TM)
    n_btiles = B_pad // TM

    # ----- reduction tile (divisor of F_pad, lane-dense, up to 2048) -------
    TK = _pick_tk(F_pad, target=2048)
    grid = (n_btiles, F_pad // TK)

    # ----- activation pad+cast (single fused pass, skipped if aligned) -----
    x_bf = x_flat.astype(jnp.bfloat16)
    if (B_pad, F_pad) != (B, F):
        x_p = jnp.pad(x_bf, ((0, B_pad - B), (0, F_pad - F)))
    else:
        x_p = x_bf

    # ----- weight residency decision ---------------------------------------
    w_bytes = F_pad * D_pad * 2
    pt_bytes = D_pad * C_pad * 2
    resident = (w_bytes + pt_bytes) <= _WEIGHT_RESIDENT_BUDGET

    if resident:
        # index_map constant over the whole grid -> weight DMA'd exactly once.
        w_spec = pl.BlockSpec((F_pad, D_pad), lambda i, k: (0, 0))
        w_hbm_bytes = w_bytes
    else:
        w_spec = pl.BlockSpec((TK, D_pad), lambda i, k: (k, 0))
        w_hbm_bytes = w_bytes * n_btiles        # re-streamed per batch tile

    # ----- VMEM budget / scoped-limit (v5e default is only 16 MiB) ---------
    vmem_need = (
        (w_bytes if resident else 2 * TK * D_pad * 2)
        + pt_bytes + D_pad * 4
        + 2 * TM * TK * 2        # double-buffered x tiles
        + TM * D_pad * 4         # f32 accumulator scratch
        + 2 * TM * C_pad * 4     # output tile
    )
    vmem_limit = int(min(max(vmem_need + 16 * 1024 * 1024, 32 * 1024 * 1024),
                         48 * 1024 * 1024))

    cost = pl.CostEstimate(
        flops=2 * B_pad * F_pad * D_pad + 2 * B_pad * D_pad * C_pad,
        transcendentals=B_pad,
        bytes_accessed=(2 * B_pad * F_pad          # bf16 activations
                        + w_hbm_bytes              # weight (resident or re-streamed)
                        + pt_bytes                 # prototypes
                        + 4 * D_pad                # bias
                        + 4 * B_pad * C_pad),      # f32 logits
    )

    out = pl.pallas_call(
        _make_hsp_kernel(resident, TK),
        out_shape=jax.ShapeDtypeStruct((B_pad, C_pad), jnp.float32),
        grid_spec=pltpu.PrefetchScalarGridSpec(
            num_scalar_prefetch=0,
            grid=grid,
            in_specs=[
                pl.BlockSpec((TM, TK), lambda i, k: (i, k)),        # x tile
                w_spec,                                             # weight
                pl.BlockSpec((1, D_pad), lambda i, k: (0, 0)),      # bias
                pl.BlockSpec((D_pad, C_pad), lambda i, k: (0, 0)),  # polars.T
            ],
            out_specs=pl.BlockSpec((TM, C_pad), lambda i, k: (i, 0)),
            scratch_shapes=[pltpu.VMEM((TM, D_pad), jnp.float32)],
        ),
        compiler_params=pltpu.CompilerParams(
            dimension_semantics=("parallel", "arbitrary"),
            vmem_limit_bytes=vmem_limit,
        ),
        cost_estimate=cost,
    )(x_p, params["w_t"], params["b2"], params["pt"])

    return out[:B, :C]


def _reference(x_nchw, w, b, polars):
    """Pure-JAX (f32) reference mirroring the PyTorch semantics."""
    B = x_nchw.shape[0]
    x_flat = jnp.asarray(x_nchw, jnp.float32).reshape(B, -1)
    feat = x_flat @ jnp.asarray(w, jnp.float32).T + jnp.asarray(b, jnp.float32)
    norm = jnp.sqrt(jnp.sum(feat * feat, axis=1, keepdims=True))
    normed = feat / jnp.maximum(norm, 1e-12)
    return normed @ jnp.asarray(polars, jnp.float32).T


if __name__ == "__main__":
    # Small deterministic shapes: batch=2, channels=16, spatial=16x16,
    # feature dims=32, num_classes=10.  F = 16*16*16 = 4096 so the reduction
    # axis is actually tiled (two k steps at TK=2048).
    B, C_in, H, W = 2, 16, 16, 16
    dims, num_classes = 32, 10
    F = C_in * H * W

    key = jax.random.PRNGKey(0)
    k_x, k_w, k_b, k_p = jax.random.split(key, 4)

    x = jax.random.normal(k_x, (B, C_in, H, W), dtype=jnp.float32)

    # Deterministic backbone params (flatten + Linear(F -> dims) stand-in).
    # TODO(synk): the PyTorch module wraps an arbitrary `model`; only this
    # linear backbone is fused here.
    w = jax.random.normal(k_w, (dims, F), dtype=jnp.float32) * 0.02
    b = jax.random.normal(k_b, (dims,), dtype=jnp.float32) * 0.01

    # Deterministic prototypes: random unit vectors on the hypersphere
    # (stand-in for the .npy prototype file; same shape (num_classes, dims)).
    p = jax.random.normal(k_p, (num_classes, dims), dtype=jnp.float32)
    polars = p / jnp.linalg.norm(p, axis=1, keepdims=True)

    params = prepare_hsp_params(w, b, polars)   # one-time prep, hoisted

    out = hyperspherical_prototype_forward(x, params)
    out = jax.block_until_ready(out)

    ref = _reference(x, w, b, polars)
    assert out.shape == (B, num_classes)
    # bf16 matmul inputs with f32 accumulation -> ~1e-2 achievable tolerance.
    assert jnp.allclose(out, ref, atol=3e-2, rtol=3e-2), (
        float(jnp.max(jnp.abs(out - ref))))

    print("KERNEL_OK")
</pallas_src>

<mosaic_0001>
module attributes {stable_mosaic.version = 11 : i64} {
  func.func @kernel(%arg0: i32, %arg1: i32, %arg2: memref<8x2048xbf16, #tpu.memory_space<vmem>>, %arg3: memref<4096x128xbf16, #tpu.memory_space<vmem>>, %arg4: memref<1x128xf32, #tpu.memory_space<vmem>>, %arg5: memref<128x128xbf16, #tpu.memory_space<vmem>>, %arg6: memref<8x128xf32, #tpu.memory_space<vmem>>, %arg7: memref<8x128xf32, #tpu.memory_space<vmem>>) attributes {dimension_semantics = [#tpu.dimension_semantics<parallel>, #tpu.dimension_semantics<arbitrary>], iteration_bounds = array<i64: 1, 2>, scalar_prefetch = 0 : i64, scratch_operands = 1 : i64, tpu.core_type = #tpu.core_type<tc>, window_params = [{transform_indices = @transform_0, window_bounds = array<i64: 8, 2048>}, {pipeline_mode = #tpu.pipeline_mode<synchronous>, transform_indices = @transform_1, window_bounds = array<i64: 4096, 128>}, {pipeline_mode = #tpu.pipeline_mode<synchronous>, transform_indices = @transform_2, window_bounds = array<i64: 1, 128>}, {pipeline_mode = #tpu.pipeline_mode<synchronous>, transform_indices = @transform_3, window_bounds = array<i64: 128, 128>}, {transform_indices = @transform_4, window_bounds = array<i64: 8, 128>}]} {
    %c0_i32 = arith.constant 0 : i32
    %0 = arith.cmpi eq, %arg1, %c0_i32 : i32
    %1 = arith.extui %0 : i1 to i32
    %c0_i32_0 = arith.constant 0 : i32
    %2 = arith.cmpi ne, %1, %c0_i32_0 : i32
    scf.if %2 {
      %c0_8 = arith.constant 0 : index
      %c0_9 = arith.constant 0 : index
      %15 = vector.load %arg4[%c0_8, %c0_9] : memref<1x128xf32, #tpu.memory_space<vmem>>, vector<1x128xf32>
      %16 = vector.shape_cast %15 : vector<1x128xf32> to vector<1x128xf32>
      %17 = vector.broadcast %16 : vector<1x128xf32> to vector<8x128xf32>
      %c0_10 = arith.constant 0 : index
      %c0_11 = arith.constant 0 : index
      %18 = vector.load %arg7[%c0_10, %c0_11] : memref<8x128xf32, #tpu.memory_space<vmem>>, vector<8x128xf32>
      tpu.vector_store %arg7[%c0_10, %c0_11], %17 {strides = array<i32>} : memref<8x128xf32, #tpu.memory_space<vmem>>, vector<8x128xf32>,
    } else {
    }
    %c2048_i32 = arith.constant 2048 : i32
    %3 = arith.muli %arg1, %c2048_i32 : i32
    %4 = tpu.assume_multiple %3, 128 : i32
    %5 = arith.index_cast %4 : i32 to index
    %c0 = arith.constant 0 : index
    %6 = vector.load %arg3[%5, %c0] : memref<4096x128xbf16, #tpu.memory_space<vmem>>, vector<2048x128xbf16>
    %c0_1 = arith.constant 0 : index
    %c0_2 = arith.constant 0 : index
    %7 = vector.load %arg7[%c0_1, %c0_2] : memref<8x128xf32, #tpu.memory_space<vmem>>, vector<8x128xf32>
    %c0_3 = arith.constant 0 : index
    %c0_4 = arith.constant 0 : index
    %8 = vector.load %arg2[%c0_3, %c0_4] : memref<8x2048xbf16, #tpu.memory_space<vmem>>, vector<8x2048xbf16>
    %cst = arith.constant dense<0.000000e+00> : vector<8x128xf32>
    %9 = tpu.matmul %8, %6, %cst {dimension_numbers = #tpu.dot_dimension_numbers<[1], [0], [0], [1], [0, 0, 1, 1], [], []>} : vector<8x2048xbf16>, vector<2048x128xbf16>, vector<8x128xf32> -> vector<8x128xf32>
    %10 = arith.addf %7, %9 : vector<8x128xf32>
    %c0_5 = arith.constant 0 : index
    %c0_6 = arith.constant 0 : index
    %11 = vector.load %arg7[%c0_5, %c0_6] : memref<8x128xf32, #tpu.memory_space<vmem>>, vector<8x128xf32>
    tpu.vector_store %arg7[%c0_5, %c0_6], %10 {strides = array<i32>} : memref<8x128xf32, #tpu.memory_space<vmem>>, vector<8x128xf32>,
    %c1_i32 = arith.constant 1 : i32
    %12 = arith.cmpi eq, %arg1, %c1_i32 : i32
    %13 = arith.extui %12 : i1 to i32
    %c0_i32_7 = arith.constant 0 : i32
    %14 = arith.cmpi ne, %13, %c0_i32_7 : i32
    scf.if %14 {
      %c0_8 = arith.constant 0 : index
      %c0_9 = arith.constant 0 : index
      %15 = vector.load %arg7[%c0_8, %c0_9] : memref<8x128xf32, #tpu.memory_space<vmem>>, vector<8x128xf32>
      %16 = arith.mulf %15, %15 : vector<8x128xf32>
      %cst_10 = arith.constant dense<0.000000e+00> : vector<8xf32>
      %17 = vector.multi_reduction <add>, %16, %cst_10 [1] : vector<8x128xf32> to vector<8xf32>
      %18 = vector.shape_cast %17 : vector<8xf32> to vector<8x1xf32>
      %cst_11 = arith.constant 1.000000e-24 : f32
      %19 = vector.broadcast %cst_11 : f32 to vector<8x1xf32>
      %20 = arith.maximumf %18, %19 : vector<8x1xf32>
      %21 = math.rsqrt %20 : vector<8x1xf32>
      %22 = arith.truncf %15 : vector<8x128xf32> to vector<8x128xbf16>
      %c0_12 = arith.constant 0 : index
      %c0_13 = arith.constant 0 : index
      %23 = vector.load %arg5[%c0_12, %c0_13] : memref<128x128xbf16, #tpu.memory_space<vmem>>, vector<128x128xbf16>
      %cst_14 = arith.constant dense<0.000000e+00> : vector<8x128xf32>
      %24 = tpu.matmul %22, %23, %cst_14 {dimension_numbers = #tpu.dot_dimension_numbers<[1], [0], [0], [1], [0, 0, 1, 1], [], []>} : vector<8x128xbf16>, vector<128x128xbf16>, vector<8x128xf32> -> vector<8x128xf32>
      %25 = vector.broadcast %21 : vector<8x1xf32> to vector<8x128xf32>
      %26 = arith.mulf %24, %25 : vector<8x128xf32>
      %c0_15 = arith.constant 0 : index
      %c0_16 = arith.constant 0 : index
      %27 = vector.load %arg6[%c0_15, %c0_16] : memref<8x128xf32, #tpu.memory_space<vmem>>, vector<8x128xf32>
      tpu.vector_store %arg6[%c0_15, %c0_16], %26 {strides = array<i32>} : memref<8x128xf32, #tpu.memory_space<vmem>>, vector<8x128xf32>,
    } else {
    }
    return
  }
  func.func @transform_0(%arg0: i32, %arg1: i32) -> (i32, i32) {
    %c0_i32 = arith.constant 0 : i32
    return %arg0, %arg1 : i32, i32
  }
  func.func @transform_1(%arg0: i32, %arg1: i32) -> (i32, i32) {
    %c0_i32 = arith.constant 0 : i32
    %c0_i32_0 = arith.constant 0 : i32
    %c0_i32_1 = arith.constant 0 : i32
    return %c0_i32, %c0_i32_0 : i32, i32
  }
  func.func @transform_2(%arg0: i32, %arg1: i32) -> (i32, i32) {
    %c0_i32 = arith.constant 0 : i32
    %c0_i32_0 = arith.constant 0 : i32
    %c0_i32_1 = arith.constant 0 : i32
    return %c0_i32, %c0_i32_0 : i32, i32
  }
  func.func @transform_3(%arg0: i32, %arg1: i32) -> (i32, i32) {
    %c0_i32 = arith.constant 0 : i32
    %c0_i32_0 = arith.constant 0 : i32
    %c0_i32_1 = arith.constant 0 : i32
    return %c0_i32, %c0_i32_0 : i32, i32
  }
  func.func @transform_4(%arg0: i32, %arg1: i32) -> (i32, i32) {
    %c0_i32 = arith.constant 0 : i32
    %c0_i32_0 = arith.constant 0 : i32
    return %arg0, %c0_i32 : i32, i32
  }
}

</mosaic_0001>

<llo_original>
// kernel: tpu_custom_call.1
$region0: #{tpu_custom_call.1}
  #allocation0 [shape = 'u32[]', space=smem, size = 0x4, offset = 0x4, fixed_abs, tag = 'smem constant byte address 0x4 - core index']
  #allocation1 [shape = 'u32[144,128]{1,0:T(1,128)}', space=vmem, size = 0x12000, scoped, tag = 'internal scratch']
  #allocation2 [shape = 'f32[8,128]{1,0:T(8,128)}', space=vmem, size = 0x1000, scoped, tag = 'scratch operand']
  %s0 = inlined_call_operand.hbm [shape: bf16[8,4096], index: 0, kind: input, shape index: {}]
  %s1 = inlined_call_operand.hbm [shape: bf16[4096,128], index: 1, kind: input, shape index: {}]
  %s2 = inlined_call_operand.vmem [shape: f32[1,128], index: 2, kind: input, shape index: {}]
  %s3 = inlined_call_operand.hbm [shape: bf16[128,128], index: 3, kind: input, shape index: {}]
  %s4 = inlined_call_operand.hbm [shape: f32[8,128], index: 4, kind: output, shape index: {}]
  %s5 = sld [smem:[#allocation0]]
  $region69: #{tpu_custom_call.1} parent=0
    _
  %s7 = ssub.s32 1, %s5
  %s8 = scalar_select 0, %s7, %s5
  $region1: #{tpu_custom_call.1} parent=0
    #allocation3 [shape = 'u8[65536]{0}', space=vmem, size = 0x10000, scoped, tag = 'input window, operand 0']
    #allocation4 [shape = 's32[2]{0}', space=sflag, size = 0x8, scoped, tag = 'scoped memory for tpu_custom_call.1']
    #allocation5 [shape = 's32[2]{0}', space=sflag, size = 0x8, scoped, tag = 'scoped memory for tpu_custom_call.1']
    #allocation6 [shape = 'u8[1048576]{0}', space=vmem, size = 0x100000, scoped, tag = 'input window, operand 1, single buffered']
    #allocation7 [shape = 's32[1]{0}', space=sflag, size = 0x4, scoped, tag = 'scoped memory for tpu_custom_call.1']
    #allocation8 [shape = 'u8[32768]{0}', space=vmem, size = 0x8000, scoped, tag = 'input window, operand 3, single buffered']
    #allocation9 [shape = 'u8[4096]{0}', space=vmem, size = 0x1000, scoped, tag = 'output window, operand 0, single buffered']
    %9 = vsyncpa [#allocation4], 0
    %s10 = scalar_lea.sflag [#allocation4], 1
    %11 = vsyncpa %s10, 0
    %12 = vsyncpa [#allocation7], 0
    %13 = vsyncpa [#allocation5], 0
    loop: start=0, step=1, limit=4
    $region2: #{tpu_custom_call.1} parent=1 // loop_pre_header
      _
    $region3: #{tpu_custom_call.1} parent=1 // loop_header
      %s15 = sphi 0, %s19
      %p16 = scmp.ge.s32.totalorder %s15, 4
      %s22 = sphi 0, %s34
      %s23 = sphi 0, %s30
      %s24 = sphi 0, %s22
      %s25 = sphi 0, %s23
      %s26 = sphi 0, %s24
      %s27 = sphi 0, %s25
      %s39 = sphi 0, %s41
      %s42 = sphi 0, %s39
      %s43 = sphi 0, %s42
      %s59 = sphi 0, %s43
      %s63 = sphi 0, %s63
      %s65 = sphi 0, %s63
      %s66 = sphi 0, %s65
      %s80 = sphi 0, %s66
      %s84 = sphi 0, %s84
      %s86 = sphi 0, %s84
      %s87 = sphi 0, %s86
      %s101 = sphi 0, %s87
      %s105 = sphi 0, %s105
      %s107 = sphi 0, %s105
      %s108 = sphi 0, %s107
      %s122 = sphi 0, %s108
      %s128 = sphi 0, %s130
      %s131 = sphi 0, %s128
      %s132 = sphi 0, %s131
      %s148 = sphi 0, %s132
    $region4: #{tpu_custom_call.1} parent=1 // loop_header_branch
      %18 = sbr.rel (%p16) target = $region8
    $region5: #{tpu_custom_call.1} parent=1 // loop_body
      %s20 = ssub.s32 %s15, 1
      %s21 = ssub.s32 %s15, 2
      %s28 = sadd.s32 1, %s23
      %p29 = scmp.ge.s32.totalorder %s28, 2
      %s30 = scalar_select %p29, 0, %s28
      %s31 = sadd.s32 1, %s22
      %s32 = scalar_select %p29, %s31, %s22
      %p33 = scmp.ge.s32.totalorder %s32, 1
      %s34 = scalar_select %p33, 0, %s32
      %s35 = ssub.s32 %s22, %s34
      %s36 = ssub.s32 %s23, %s30
      %s37 = sor.u32 %s35, %s36
      %p38 = scmp.eq.s32.totalorder %s37, 0
      %s40 = sadd.s32 %s39, 1
      %s41 = scalar_select %p38, %s39, %s40
      %p44 = pneg %p38
      %p45 = scmp.eq.s32.totalorder %s15, 1
      %p46 = por %p44, %p45
      %p47 = scmp.ne.s32.totalorder %s39, %s42
      %p48 = scmp.eq.s32.totalorder %s15, 0
      %p49 = por %p47, %p48
      %p50 = scmp.ne.s32.totalorder %s39, %s42
      %p51 = scmp.eq.s32.totalorder %s20, 1
      %p52 = por %p50, %p51
      %p53 = scmp.ne.s32.totalorder %s42, %s43
      %p54 = scmp.eq.s32.totalorder %s20, 0
      %p55 = por %p53, %p54
      %p56 = scmp.ne.s32.totalorder %s42, %s43
      %p57 = scmp.eq.s32.totalorder %s21, 1
      %p58 = por %p56, %p57
      %p60 = scmp.ne.s32.totalorder %s43, %s59
      %p61 = scmp.eq.s32.totalorder %s21, 0
      %p62 = por %p60, %p61
      %s64 = sadd.s32 %s63, 1
      %p67 = scmp.eq.s32.totalorder %s15, 1
      %p68 = scmp.ne.s32.totalorder %s63, %s65
      %p69 = scmp.eq.s32.totalorder %s15, 0
      %p70 = por %p68, %p69
      %p71 = scmp.ne.s32.totalorder %s63, %s65
      %p72 = scmp.eq.s32.totalorder %s20, 1
      %p73 = por %p71, %p72
      %p74 = scmp.ne.s32.totalorder %s65, %s66
      %p75 = scmp.eq.s32.totalorder %s20, 0
      %p76 = por %p74, %p75
      %p77 = scmp.ne.s32.totalorder %s65, %s66
      %p78 = scmp.eq.s32.totalorder %s21, 1
      %p79 = por %p77, %p78
      %p81 = scmp.ne.s32.totalorder %s66, %s80
      %p82 = scmp.eq.s32.totalorder %s21, 0
      %p83 = por %p81, %p82
      %s85 = sadd.s32 %s84, 1
      %p88 = scmp.eq.s32.totalorder %s15, 1
      %p89 = scmp.ne.s32.totalorder %s84, %s86
      %p90 = scmp.eq.s32.totalorder %s15, 0
      %p91 = por %p89, %p90
      %p92 = scmp.ne.s32.totalorder %s84, %s86
      %p93 = scmp.eq.s32.totalorder %s20, 1
      %p94 = por %p92, %p93
      %p95 = scmp.ne.s32.totalorder %s86, %s87
      %p96 = scmp.eq.s32.totalorder %s20, 0
      %p97 = por %p95, %p96
      %p98 = scmp.ne.s32.totalorder %s86, %s87
      %p99 = scmp.eq.s32.totalorder %s21, 1
      %p100 = por %p98, %p99
      %p102 = scmp.ne.s32.totalorder %s87, %s101
      %p103 = scmp.eq.s32.totalorder %s21, 0
      %p104 = por %p102, %p103
      %s106 = sadd.s32 %s105, 1
      %p109 = scmp.eq.s32.totalorder %s15, 1
      %p110 = scmp.ne.s32.totalorder %s105, %s107
      %p111 = scmp.eq.s32.totalorder %s15, 0
      %p112 = por %p110, %p111
      %p113 = scmp.ne.s32.totalorder %s105, %s107
      %p114 = scmp.eq.s32.totalorder %s20, 1
      %p115 = por %p113, %p114
      %p116 = scmp.ne.s32.totalorder %s107, %s108
      %p117 = scmp.eq.s32.totalorder %s20, 0
      %p118 = por %p116, %p117
      %p119 = scmp.ne.s32.totalorder %s107, %s108
      %p120 = scmp.eq.s32.totalorder %s21, 1
      %p121 = por %p119, %p120
      %p123 = scmp.ne.s32.totalorder %s108, %s122
      %p124 = scmp.eq.s32.totalorder %s21, 0
      %p125 = por %p123, %p124
      %s126 = ssub.s32 %s22, %s34
      %p127 = scmp.eq.s32.totalorder %s126, 0
      %s129 = sadd.s32 %s128, 1
      %s130 = scalar_select %p127, %s128, %s129
      %p133 = pneg %p127
      %p134 = scmp.eq.s32.totalorder %s15, 1
      %p135 = por %p133, %p134
      %p136 = scmp.ne.s32.totalorder %s128, %s131
      %p137 = scmp.eq.s32.totalorder %s15, 0
      %p138 = por %p136, %p137
      %p139 = scmp.ne.s32.totalorder %s128, %s131
      %p140 = scmp.eq.s32.totalorder %s20, 1
      %p141 = por %p139, %p140
      %p142 = scmp.ne.s32.totalorder %s131, %s132
      %p143 = scmp.eq.s32.totalorder %s20, 0
      %p144 = por %p142, %p143
      %p145 = scmp.ne.s32.totalorder %s131, %s132
      %p146 = scmp.eq.s32.totalorder %s21, 1
      %p147 = por %p145, %p146
      %p149 = scmp.ne.s32.totalorder %s132, %s148
      %p150 = scmp.eq.s32.totalorder %s21, 0
      %p151 = por %p149, %p150
      %p152 = scmp.le.s32.totalorder 1, %s15
      %p153 = scmp.lt.s32.totalorder %s15, 3
      %p154 = pnand %p152, %p153
      %p155 = pneg %p154
      // Predicated region
      $region9: #{tpu_custom_call.1} parent=5 // pred_check
        _
      $region10: #{tpu_custom_call.1} parent=5 // pred_check_branch
        %157 = sbr.rel (%p154) target = $region12
      $region11: #{tpu_custom_call.1} parent=5 // pred_region
        %s158 = ssub.s32 %s15, 1
        // Predicated region
        $region13: #{tpu_custom_call.1} parent=11 // pred_check
          %p159 = pneg %p76
        $region14: #{tpu_custom_call.1} parent=11 // pred_check_branch
          %161 = sbr.rel (%p159) target = $region16
        $region15: #{tpu_custom_call.1} parent=11 // pred_region
          %s163 = ssub.s32 32768, 32768
          %164 = vsyncadd [#allocation7], %s163
          %s165 = sshll.u32 [#allocation6], 4
          %s166 = int_to_ptr.vmem [resolvable:$true] %s165
          %171 = dma.hbm_to_vmem [thread:$0]  %s1, 32768, %s166, [#allocation7], 64, 64, 4
        $region16: #{tpu_custom_call.1} parent=11 // pred_fallthru
          _
        // Predicated region
        $region17: #{tpu_custom_call.1} parent=11 // pred_check
          %p172 = pneg %p97
        $region18: #{tpu_custom_call.1} parent=11 // pred_check_branch
          %174 = sbr.rel (%p172) target = $region20
        $region19: #{tpu_custom_call.1} parent=11 // pred_region
          _
        $region20: #{tpu_custom_call.1} parent=11 // pred_fallthru
          _
        // Predicated region
        $region21: #{tpu_custom_call.1} parent=11 // pred_check
          %p175 = pneg %p118
        $region22: #{tpu_custom_call.1} parent=11 // pred_check_branch
          %177 = sbr.rel (%p175) target = $region24
        $region23: #{tpu_custom_call.1} parent=11 // pred_region
          %s179 = ssub.s32 1024, 1024
          %180 = vsyncadd [#allocation7], %s179
          %s181 = sshll.u32 [#allocation8], 4
          %s182 = int_to_ptr.vmem [resolvable:$true] %s181
          %187 = dma.hbm_to_vmem [thread:$0]  %s3, 1024, %s182, [#allocation7], 64, 64, 4
        $region24: #{tpu_custom_call.1} parent=11 // pred_fallthru
          _
      $region12: #{tpu_custom_call.1} parent=5 // pred_fallthru
        _
      %p188 = scmp.lt.s32.totalorder %s15, 2
      // Predicated region
      $region25: #{tpu_custom_call.1} parent=5 // pred_check
        %p189 = pneg %p188
      $region26: #{tpu_custom_call.1} parent=5 // pred_check_branch
        %191 = sbr.rel (%p189) target = $region28
      $region27: #{tpu_custom_call.1} parent=5 // pred_region
        // Predicated region
        $region29: #{tpu_custom_call.1} parent=27 // pred_check
          %p192 = pneg %p49
        $region30: #{tpu_custom_call.1} parent=27 // pred_check_branch
          %194 = sbr.rel (%p192) target = $region32
        $region31: #{tpu_custom_call.1} parent=27 // pred_region
          %s195 = sand.u32 %s39, 1
          %s196 = scalar_lea.sflag [#allocation4], %s195
          %s197 = sand.u32 %s39, 1
          %s198 = smul.addr %s197, 64
          %s199 = scalar_lea.vmem [#allocation3], %s198
          %s200 = smul.u32 16, %s23
          %s202 = ssub.s32 1024, 1024
          %203 = vsyncadd %s196, %s202
          %s204 = smul.addr %s22, 32
          %s205 = sadd.s32 %s200, %s204
          %s206 = smul.addr %s205, 64
          %s207 = scalar_lea.hbm %s0, %s206
          %s209 = sshll.u32 %s199, 4
          %s210 = int_to_ptr.vmem [resolvable:$true] %s209
          %212 = dma.hbm_to_vmem [thread:$0]  %s207, 1024, %s210, %s196
        $region32: #{tpu_custom_call.1} parent=27 // pred_fallthru
          _
      $region28: #{tpu_custom_call.1} parent=5 // pred_fallthru
        _
      %p213 = scmp.le.s32.totalorder 1, %s15
      %p214 = scmp.lt.s32.totalorder %s15, 3
      %p215 = pnand %p213, %p214
      %p216 = pneg %p215
      // Predicated region
      $region33: #{tpu_custom_call.1} parent=5 // pred_check
        _
      $region34: #{tpu_custom_call.1} parent=5 // pred_check_branch
        %218 = sbr.rel (%p215) target = $region36
      $region35: #{tpu_custom_call.1} parent=5 // pred_region
        %s219 = ssub.s32 %s15, 1
        %s220 = sand.u32 %s42, 1
        %s221 = scalar_lea.sflag [#allocation4], %s220
        %s222 = sand.u32 %s42, 1
        %s223 = smul.addr %s222, 64
        %s224 = scalar_lea.vmem [#allocation3], %s223
        // Predicated region
        $region37: #{tpu_custom_call.1} parent=35 // pred_check
          %p225 = pneg %p55
        $region38: #{tpu_custom_call.1} parent=35 // pred_check_branch
          %227 = sbr.rel (%p225) target = $region40
        $region39: #{tpu_custom_call.1} parent=35 // pred_region
          %228 = dma.done %s221, 1024
        $region40: #{tpu_custom_call.1} parent=35 // pred_fallthru
          _
        // Predicated region
        $region41: #{tpu_custom_call.1} parent=35 // pred_check
          %p229 = pneg %p76
        $region42: #{tpu_custom_call.1} parent=35 // pred_check_branch
          %231 = sbr.rel (%p229) target = $region44
        $region43: #{tpu_custom_call.1} parent=35 // pred_region
          %232 = dma.done [#allocation7], 32768
        $region44: #{tpu_custom_call.1} parent=35 // pred_fallthru
          _
        // Predicated region
        $region45: #{tpu_custom_call.1} parent=35 // pred_check
          %p233 = pneg %p118
        $region46: #{tpu_custom_call.1} parent=35 // pred_check_branch
          %235 = sbr.rel (%p233) target = $region48
        $region47: #{tpu_custom_call.1} parent=35 // pred_region
          %236 = dma.done [#allocation7], 1024
        $region48: #{tpu_custom_call.1} parent=35 // pred_fallthru
          _
        %s237 = sand.u32 %s42, 1
        %s238 = scalar_lea.sflag [#allocation4], %s237
        %s239 = sand.u32 %s42, 1
        %s240 = smul.addr %s239, 64
        %s241 = scalar_lea.vmem [#allocation3], %s240
        %p242 = pneg %p55
        %p243 = pneg %p52
        %p244 = pneg %p76
        %p245 = pneg %p73
        %p246 = pneg %p97
        %p247 = pneg %p94
        %p248 = pneg %p118
        %p249 = pneg %p115
        %p250 = pneg %p144
        %p251 = pneg %p141
        %s252 = smul.u32 16, %s25
        %p254 = scmp.eq.s32.totalorder %s25, 0
        // Predicated region
        $region49: #{tpu_custom_call.1} parent=35 // pred_check
          %p255 = pneg %p254
        $region50: #{tpu_custom_call.1} parent=35 // pred_check_branch
          %257 = sbr.rel (%p255) target = $region52
        $region51: #{tpu_custom_call.1} parent=35 // pred_region
          %v258 = vld [vmem:[%s2] sm:$0x1]
          %v260 = vlaneseq
          %v261 = vshrl.u32 %v260, 7
          %v262 = vsub.s32 0, %v261
          %v263 = vrot.slane %v258, %v262
          %265 = vst [vmem:[#allocation2] sm:$0xff] %v263
        $region52: #{tpu_custom_call.1} parent=35 // pred_fallthru
          _
        %s266 = smul.u32 %s25, 2048
        %s267 = sshra.s32 %s266, 3
        %s268 = sand.u32 %s266, 7
        %s269 = smul.addr %s267, 4
        %s270 = scalar_lea.vmem [#allocation6], %s269
        %v271 = vld [vmem:[%s270] sm:$0xf]
        %v272 = vld [vmem:[%s270 + $0x4] sm:$0xf]
        %v273 = vld [vmem:[%s270 + $0x8] sm:$0xf]
        %v274 = vld [vmem:[%s270 + $0xc] sm:$0xf]
        %v275 = vld [vmem:[%s270 + $0x10] sm:$0xf]
        %v276 = vld [vmem:[%s270 + $0x14] sm:$0xf]
        %v277 = vld [vmem:[%s270 + $0x18] sm:$0xf]
        %v278 = vld [vmem:[%s270 + $0x1c] sm:$0xf]
        %v279 = vld [vmem:[%s270 + $0x20] sm:$0xf]
        %v280 = vld [vmem:[%s270 + $0x24] sm:$0xf]
        %v281 = vld [vmem:[%s270 + $0x28] sm:$0xf]
        %v282 = vld [vmem:[%s270 + $0x2c] sm:$0xf]
        %v283 = vld [vmem:[%s270 + $0x30] sm:$0xf]
        %v284 = vld [vmem:[%s270 + $0x34] sm:$0xf]
        %v285 = vld [vmem:[%s270 + $0x38] sm:$0xf]
        %v286 = vld [vmem:[%s270 + $0x3c] sm:$0xf]
        %v287 = vld [vmem:[%s270 + $0x40] sm:$0xf]
        %v288 = vld [vmem:[%s270 + $0x44] sm:$0xf]
        %v289 = vld [vmem:[%s270 + $0x48] sm:$0xf]
        %v290 = vld [vmem:[%s270 + $0x4c] sm:$0xf]
        %v291 = vld [vmem:[%s270 + $0x50] sm:$0xf]
        %v292 = vld [vmem:[%s270 + $0x54] sm:$0xf]
        %v293 = vld [vmem:[%s270 + $0x58] sm:$0xf]
        %v294 = vld [vmem:[%s270 + $0x5c] sm:$0xf]
        %v295 = vld [vmem:[%s270 + $0x60] sm:$0xf]
        %v296 = vld [vmem:[%s270 + $0x64] sm:$0xf]
        %v297 = vld [vmem:[%s270 + $0x68] sm:$0xf]
        %v298 = vld [vmem:[%s270 + $0x6c] sm:$0xf]
        %v299 = vld [vmem:[%s270 + $0x70] sm:$0xf]
        %v300 = vld [vmem:[%s270 + $0x74] sm:$0xf]
        %v301 = vld [vmem:[%s270 + $0x78] sm:$0xf]
        %v302 = vld [vmem:[%s270 + $0x7c] sm:$0xf]
        %v303 = vld [vmem:[%s270 + $0x80] sm:$0xf]
        %v304 = vld [vmem:[%s270 + $0x84] sm:$0xf]
        %v305 = vld [vmem:[%s270 + $0x88] sm:$0xf]
        %v306 = vld [vmem:[%s270 + $0x8c] sm:$0xf]
        %v307 = vld [vmem:[%s270 + $0x90] sm:$0xf]
        %v308 = vld [vmem:[%s270 + $0x94] sm:$0xf]
        %v309 = vld [vmem:[%s270 + $0x98] sm:$0xf]
        %v310 = vld [vmem:[%s270 + $0x9c] sm:$0xf]
        %v311 = vld [vmem:[%s270 + $0xa0] sm:$0xf]
        %v312 = vld [vmem:[%s270 + $0xa4] sm:$0xf]
        %v313 = vld [vmem:[%s270 + $0xa8] sm:$0xf]
        %v314 = vld [vmem:[%s270 + $0xac] sm:$0xf]
        %v315 = vld [vmem:[%s270 + $0xb0] sm:$0xf]
        %v316 = vld [vmem:[%s270 + $0xb4] sm:$0xf]
        %v317 = vld [vmem:[%s270 + $0xb8] sm:$0xf]
        %v318 = vld [vmem:[%s270 + $0xbc] sm:$0xf]
        %v319 = vld [vmem:[%s270 + $0xc0] sm:$0xf]
        %v320 = vld [vmem:[%s270 + $0xc4] sm:$0xf]
        %v321 = vld [vmem:[%s270 + $0xc8] sm:$0xf]
        %v322 = vld [vmem:[%s270 + $0xcc] sm:$0xf]
        %v323 = vld [vmem:[%s270 + $0xd0] sm:$0xf]
        %v324 = vld [vmem:[%s270 + $0xd4] sm:$0xf]
        %v325 = vld [vmem:[%s270 + $0xd8] sm:$0xf]
        %v326 = vld [vmem:[%s270 + $0xdc] sm:$0xf]
        %v327 = vld [vmem:[%s270 + $0xe0] sm:$0xf]
        %v328 = vld [vmem:[%s270 + $0xe4] sm:$0xf]
        %v329 = vld [vmem:[%s270 + $0xe8] sm:$0xf]
        %v330 = vld [vmem:[%s270 + $0xec] sm:$0xf]
        %v331 = vld [vmem:[%s270 + $0xf0] sm:$0xf]
        %v332 = vld [vmem:[%s270 + $0xf4] sm:$0xf]
        %v333 = vld [vmem:[%s270 + $0xf8] sm:$0xf]
        %v334 = vld [vmem:[%s270 + $0xfc] sm:$0xf]
        %v335 = vld [vmem:[%s270 + $0x100] sm:$0xf]
        %v336 = vld [vmem:[%s270 + $0x104] sm:$0xf]
        %v337 = vld [vmem:[%s270 + $0x108] sm:$0xf]
        %v338 = vld [vmem:[%s270 + $0x10c] sm:$0xf]
        %v339 = vld [vmem:[%s270 + $0x110] sm:$0xf]
        %v340 = vld [vmem:[%s270 + $0x114] sm:$0xf]
        %v341 = vld [vmem:[%s270 + $0x118] sm:$0xf]
        %v342 = vld [vmem:[%s270 + $0x11c] sm:$0xf]
        %v343 = vld [vmem:[%s270 + $0x120] sm:$0xf]
        %v344 = vld [vmem:[%s270 + $0x124] sm:$0xf]
        %v345 = vld [vmem:[%s270 + $0x128] sm:$0xf]
        %v346 = vld [vmem:[%s270 + $0x12c] sm:$0xf]
        %v347 = vld [vmem:[%s270 + $0x130] sm:$0xf]
        %v348 = vld [vmem:[%s270 + $0x134] sm:$0xf]
        %v349 = vld [vmem:[%s270 + $0x138] sm:$0xf]
        %v350 = vld [vmem:[%s270 + $0x13c] sm:$0xf]
        %v351 = vld [vmem:[%s270 + $0x140] sm:$0xf]
        %v352 = vld [vmem:[%s270 + $0x144] sm:$0xf]
        %v353 = vld [vmem:[%s270 + $0x148] sm:$0xf]
        %v354 = vld [vmem:[%s270 + $0x14c] sm:$0xf]
        %v355 = vld [vmem:[%s270 + $0x150] sm:$0xf]
        %v356 = vld [vmem:[%s270 + $0x154] sm:$0xf]
        %v357 = vld [vmem:[%s270 + $0x158] sm:$0xf]
        %v358 = vld [vmem:[%s270 + $0x15c] sm:$0xf]
        %v359 = vld [vmem:[%s270 + $0x160] sm:$0xf]
        %v360 = vld [vmem:[%s270 + $0x164] sm:$0xf]
        %v361 = vld [vmem:[%s270 + $0x168] sm:$0xf]
        %v362 = vld [vmem:[%s270 + $0x16c] sm:$0xf]
        %v363 = vld [vmem:[%s270 + $0x170] sm:$0xf]
        %v364 = vld [vmem:[%s270 + $0x174] sm:$0xf]
        %v365 = vld [vmem:[%s270 + $0x178] sm:$0xf]
        %v366 = vld [vmem:[%s270 + $0x17c] sm:$0xf]
        %v367 = vld [vmem:[%s270 + $0x180] sm:$0xf]
        %v368 = vld [vmem:[%s270 + $0x184] sm:$0xf]
        %v369 = vld [vmem:[%s270 + $0x188] sm:$0xf]
        %v370 = vld [vmem:[%s270 + $0x18c] sm:$0xf]
        %v371 = vld [vmem:[%s270 + $0x190] sm:$0xf]
        %v372 = vld [vmem:[%s270 + $0x194] sm:$0xf]
        %v373 = vld [vmem:[%s270 + $0x198] sm:$0xf]
        %v374 = vld [vmem:[%s270 + $0x19c] sm:$0xf]
        %v375 = vld [vmem:[%s270 + $0x1a0] sm:$0xf]
        %v376 = vld [vmem:[%s270 + $0x1a4] sm:$0xf]
        %v377 = vld [vmem:[%s270 + $0x1a8] sm:$0xf]
        %v378 = vld [vmem:[%s270 + $0x1ac] sm:$0xf]
        %v379 = vld [vmem:[%s270 + $0x1b0] sm:$0xf]
        %v380 = vld [vmem:[%s270 + $0x1b4] sm:$0xf]
        %v381 = vld [vmem:[%s270 + $0x1b8] sm:$0xf]
        %v382 = vld [vmem:[%s270 + $0x1bc] sm:$0xf]
        %v383 = vld [vmem:[%s270 + $0x1c0] sm:$0xf]
        %v384 = vld [vmem:[%s270 + $0x1c4] sm:$0xf]
        %v385 = vld [vmem:[%s270 + $0x1c8] sm:$0xf]
        %v386 = vld [vmem:[%s270 + $0x1cc] sm:$0xf]
        %v387 = vld [vmem:[%s270 + $0x1d0] sm:$0xf]
        %v388 = vld [vmem:[%s270 + $0x1d4] sm:$0xf]
        %v389 = vld [vmem:[%s270 + $0x1d8] sm:$0xf]
        %v390 = vld [vmem:[%s270 + $0x1dc] sm:$0xf]
        %v391 = vld [vmem:[%s270 + $0x1e0] sm:$0xf]
        %v392 = vld [vmem:[%s270 + $0x1e4] sm:$0xf]
        %v393 = vld [vmem:[%s270 + $0x1e8] sm:$0xf]
        %v394 = vld [vmem:[%s270 + $0x1ec] sm:$0xf]
        %v395 = vld [vmem:[%s270 + $0x1f0] sm:$0xf]
        %v396 = vld [vmem:[%s270 + $0x1f4] sm:$0xf]
        %v397 = vld [vmem:[%s270 + $0x1f8] sm:$0xf]
        %v398 = vld [vmem:[%s270 + $0x1fc] sm:$0xf]
        %v399 = vld [vmem:[%s270 + $0x200] sm:$0xf]
        %v400 = vld [vmem:[%s270 + $0x204] sm:$0xf]
        %v401 = vld [vmem:[%s270 + $0x208] sm:$0xf]
        %v402 = vld [vmem:[%s270 + $0x20c] sm:$0xf]
        %v403 = vld [vmem:[%s270 + $0x210] sm:$0xf]
        %v404 = vld [vmem:[%s270 + $0x214] sm:$0xf]
        %v405 = vld [vmem:[%s270 + $0x218] sm:$0xf]
        %v406 = vld [vmem:[%s270 + $0x21c] sm:$0xf]
        %v407 = vld [vmem:[%s270 + $0x220] sm:$0xf]
        %v408 = vld [vmem:[%s270 + $0x224] sm:$0xf]
        %v409 = vld [vmem:[%s270 + $0x228] sm:$0xf]
        %v410 = vld [vmem:[%s270 + $0x22c] sm:$0xf]
        %v411 = vld [vmem:[%s270 + $0x230] sm:$0xf]
        %v412 = vld [vmem:[%s270 + $0x234] sm:$0xf]
        %v413 = vld [vmem:[%s270 + $0x238] sm:$0xf]
        %v414 = vld [vmem:[%s270 + $0x23c] sm:$0xf]
        %v415 = vld [vmem:[%s270 + $0x240] sm:$0xf]
        %v416 = vld [vmem:[%s270 + $0x244] sm:$0xf]
        %v417 = vld [vmem:[%s270 + $0x248] sm:$0xf]
        %v418 = vld [vmem:[%s270 + $0x24c] sm:$0xf]
        %v419 = vld [vmem:[%s270 + $0x250] sm:$0xf]
        %v420 = vld [vmem:[%s270 + $0x254] sm:$0xf]
        %v421 = vld [vmem:[%s270 + $0x258] sm:$0xf]
        %v422 = vld [vmem:[%s270 + $0x25c] sm:$0xf]
        %v423 = vld [vmem:[%s270 + $0x260] sm:$0xf]
        %v424 = vld [vmem:[%s270 + $0x264] sm:$0xf]
        %v425 = vld [vmem:[%s270 + $0x268] sm:$0xf]
        %v426 = vld [vmem:[%s270 + $0x26c] sm:$0xf]
        %v427 = vld [vmem:[%s270 + $0x270] sm:$0xf]
        %v428 = vld [vmem:[%s270 + $0x274] sm:$0xf]
        %v429 = vld [vmem:[%s270 + $0x278] sm:$0xf]
        %v430 = vld [vmem:[%s270 + $0x27c] sm:$0xf]
        %v431 = vld [vmem:[%s270 + $0x280] sm:$0xf]
        %v432 = vld [vmem:[%s270 + $0x284] sm:$0xf]
        %v433 = vld [vmem:[%s270 + $0x288] sm:$0xf]
        %v434 = vld [vmem:[%s270 + $0x28c] sm:$0xf]
        %v435 = vld [vmem:[%s270 + $0x290] sm:$0xf]
        %v436 = vld [vmem:[%s270 + $0x294] sm:$0xf]
        %v437 = vld [vmem:[%s270 + $0x298] sm:$0xf]
        %v438 = vld [vmem:[%s270 + $0x29c] sm:$0xf]
        %v439 = vld [vmem:[%s270 + $0x2a0] sm:$0xf]
        %v440 = vld [vmem:[%s270 + $0x2a4] sm:$0xf]
        %v441 = vld [vmem:[%s270 + $0x2a8] sm:$0xf]
        %v442 = vld [vmem:[%s270 + $0x2ac] sm:$0xf]
        %v443 = vld [vmem:[%s270 + $0x2b0] sm:$0xf]
        %v444 = vld [vmem:[%s270 + $0x2b4] sm:$0xf]
        %v445 = vld [vmem:[%s270 + $0x2b8] sm:$0xf]
        %v446 = vld [vmem:[%s270 + $0x2bc] sm:$0xf]
        %v447 = vld [vmem:[%s270 + $0x2c0] sm:$0xf]
        %v448 = vld [vmem:[%s270 + $0x2c4] sm:$0xf]
        %v449 = vld [vmem:[%s270 + $0x2c8] sm:$0xf]
        %v450 = vld [vmem:[%s270 + $0x2cc] sm:$0xf]
        %v451 = vld [vmem:[%s270 + $0x2d0] sm:$0xf]
        %v452 = vld [vmem:[%s270 + $0x2d4] sm:$0xf]
        %v453 = vld [vmem:[%s270 + $0x2d8] sm:$0xf]
        %v454 = vld [vmem:[%s270 + $0x2dc] sm:$0xf]
        %v455 = vld [vmem:[%s270 + $0x2e0] sm:$0xf]
        %v456 = vld [vmem:[%s270 + $0x2e4] sm:$0xf]
        %v457 = vld [vmem:[%s270 + $0x2e8] sm:$0xf]
        %v458 = vld [vmem:[%s270 + $0x2ec] sm:$0xf]
        %v459 = vld [vmem:[%s270 + $0x2f0] sm:$0xf]
        %v460 = vld [vmem:[%s270 + $0x2f4] sm:$0xf]
        %v461 = vld [vmem:[%s270 + $0x2f8] sm:$0xf]
        %v462 = vld [vmem:[%s270 + $0x2fc] sm:$0xf]
        %v463 = vld [vmem:[%s270 + $0x300] sm:$0xf]
        %v464 = vld [vmem:[%s270 + $0x304] sm:$0xf]
        %v465 = vld [vmem:[%s270 + $0x308] sm:$0xf]
        %v466 = vld [vmem:[%s270 + $0x30c] sm:$0xf]
        %v467 = vld [vmem:[%s270 + $0x310] sm:$0xf]
        %v468 = vld [vmem:[%s270 + $0x314] sm:$0xf]
        %v469 = vld [vmem:[%s270 + $0x318] sm:$0xf]
        %v470 = vld [vmem:[%s270 + $0x31c] sm:$0xf]
        %v471 = vld [vmem:[%s270 + $0x320] sm:$0xf]
        %v472 = vld [vmem:[%s270 + $0x324] sm:$0xf]
        %v473 = vld [vmem:[%s270 + $0x328] sm:$0xf]
        %v474 = vld [vmem:[%s270 + $0x32c] sm:$0xf]
        %v475 = vld [vmem:[%s270 + $0x330] sm:$0xf]
        %v476 = vld [vmem:[%s270 + $0x334] sm:$0xf]
        %v477 = vld [vmem:[%s270 + $0x338] sm:$0xf]
        %v478 = vld [vmem:[%s270 + $0x33c] sm:$0xf]
        %v479 = vld [vmem:[%s270 + $0x340] sm:$0xf]
        %v480 = vld [vmem:[%s270 + $0x344] sm:$0xf]
        %v481 = vld [vmem:[%s270 + $0x348] sm:$0xf]
        %v482 = vld [vmem:[%s270 + $0x34c] sm:$0xf]
        %v483 = vld [vmem:[%s270 + $0x350] sm:$0xf]
        %v484 = vld [vmem:[%s270 + $0x354] sm:$0xf]
        %v485 = vld [vmem:[%s270 + $0x358] sm:$0xf]
        %v486 = vld [vmem:[%s270 + $0x35c] sm:$0xf]
        %v487 = vld [vmem:[%s270 + $0x360] sm:$0xf]
        %v488 = vld [vmem:[%s270 + $0x364] sm:$0xf]
        %v489 = vld [vmem:[%s270 + $0x368] sm:$0xf]
        %v490 = vld [vmem:[%s270 + $0x36c] sm:$0xf]
        %v491 = vld [vmem:[%s270 + $0x370] sm:$0xf]
        %v492 = vld [vmem:[%s270 + $0x374] sm:$0xf]
        %v493 = vld [vmem:[%s270 + $0x378] sm:$0xf]
        %v494 = vld [vmem:[%s270 + $0x37c] sm:$0xf]
        %v495 = vld [vmem:[%s270 + $0x380] sm:$0xf]
        %v496 = vld [vmem:[%s270 + $0x384] sm:$0xf]
        %v497 = vld [vmem:[%s270 + $0x388] sm:$0xf]
        %v498 = vld [vmem:[%s270 + $0x38c] sm:$0xf]
        %v499 = vld [vmem:[%s270 + $0x390] sm:$0xf]
        %v500 = vld [vmem:[%s270 + $0x394] sm:$0xf]
        %v501 = vld [vmem:[%s270 + $0x398] sm:$0xf]
        %v502 = vld [vmem:[%s270 + $0x39c] sm:$0xf]
        %v503 = vld [vmem:[%s270 + $0x3a0] sm:$0xf]
        %v504 = vld [vmem:[%s270 + $0x3a4] sm:$0xf]
        %v505 = vld [vmem:[%s270 + $0x3a8] sm:$0xf]
        %v506 = vld [vmem:[%s270 + $0x3ac] sm:$0xf]
        %v507 = vld [vmem:[%s270 + $0x3b0] sm:$0xf]
        %v508 = vld [vmem:[%s270 + $0x3b4] sm:$0xf]
        %v509 = vld [vmem:[%s270 + $0x3b8] sm:$0xf]
        %v510 = vld [vmem:[%s270 + $0x3bc] sm:$0xf]
        %v511 = vld [vmem:[%s270 + $0x3c0] sm:$0xf]
        %v512 = vld [vmem:[%s270 + $0x3c4] sm:$0xf]
        %v513 = vld [vmem:[%s270 + $0x3c8] sm:$0xf]
        %v514 = vld [vmem:[%s270 + $0x3cc] sm:$0xf]
        %v515 = vld [vmem:[%s270 + $0x3d0] sm:$0xf]
        %v516 = vld [vmem:[%s270 + $0x3d4] sm:$0xf]
        %v517 = vld [vmem:[%s270 + $0x3d8] sm:$0xf]
        %v518 = vld [vmem:[%s270 + $0x3dc] sm:$0xf]
        %v519 = vld [vmem:[%s270 + $0x3e0] sm:$0xf]
        %v520 = vld [vmem:[%s270 + $0x3e4] sm:$0xf]
        %v521 = vld [vmem:[%s270 + $0x3e8] sm:$0xf]
        %v522 = vld [vmem:[%s270 + $0x3ec] sm:$0xf]
        %v523 = vld [vmem:[%s270 + $0x3f0] sm:$0xf]
        %v524 = vld [vmem:[%s270 + $0x3f4] sm:$0xf]
        %v525 = vld [vmem:[%s270 + $0x3f8] sm:$0xf]
        %v526 = vld [vmem:[%s270 + $0x3fc] sm:$0xf]
        %v527 = vld [vmem:[#allocation2] sm:$0xff]
        %v528 = vld [vmem:[%s224] sm:$0xff]
        %v529 = vld [vmem:[%s224 + $0x8] sm:$0xff]
        %v530 = vld [vmem:[%s224 + $0x10] sm:$0xff]
        %v531 = vld [vmem:[%s224 + $0x18] sm:$0xff]
        %v532 = vld [vmem:[%s224 + $0x20] sm:$0xff]
        %v533 = vld [vmem:[%s224 + $0x28] sm:$0xff]
        %v534 = vld [vmem:[%s224 + $0x30] sm:$0xff]
        %v535 = vld [vmem:[%s224 + $0x38] sm:$0xff]
        %v544 = vunpack.c.l.b16 %v528
        %v545 = vunpack.c.h.b16 %v528
        %v546 = vunpack.c.l.b16 %v529
        %v547 = vunpack.c.h.b16 %v529
        %v548 = vunpack.c.l.b16 %v530
        %v549 = vunpack.c.h.b16 %v530
        %v550 = vunpack.c.l.b16 %v531
        %v551 = vunpack.c.h.b16 %v531
        %v552 = vunpack.c.l.b16 %v532
        %v553 = vunpack.c.h.b16 %v532
        %v554 = vunpack.c.l.b16 %v533
        %v555 = vunpack.c.h.b16 %v533
        %v556 = vunpack.c.l.b16 %v534
        %v557 = vunpack.c.h.b16 %v534
        %v558 = vunpack.c.l.b16 %v535
        %v559 = vunpack.c.h.b16 %v535
        %v560 = vpack.c.b16 %v544, %v544
        %v561 = vpack.c.b16 %v545, %v545
        %v562 = vpack.c.b16 %v546, %v546
        %v563 = vpack.c.b16 %v547, %v547
        %v564 = vpack.c.b16 %v548, %v548
        %v565 = vpack.c.b16 %v549, %v549
        %v566 = vpack.c.b16 %v550, %v550
        %v567 = vpack.c.b16 %v551, %v551
        %v568 = vpack.c.b16 %v552, %v552
        %v569 = vpack.c.b16 %v553, %v553
        %v570 = vpack.c.b16 %v554, %v554
        %v571 = vpack.c.b16 %v555, %v555
        %v572 = vpack.c.b16 %v556, %v556
        %v573 = vpack.c.b16 %v557, %v557
        %v574 = vpack.c.b16 %v558, %v558
        %v575 = vpack.c.b16 %v559, %v559
        %v848 = vunpack.c.l.b16 %v271
        %v849 = vunpack.c.l.b16 %v272
        %v850 = vunpack.c.l.b16 %v273
        %v851 = vunpack.c.l.b16 %v274
        %v852 = vunpack.c.l.b16 %v275
        %v853 = vunpack.c.l.b16 %v276
        %v854 = vunpack.c.l.b16 %v277
        %v855 = vunpack.c.l.b16 %v278
        %v856 = vunpack.c.l.b16 %v279
        %v857 = vunpack.c.l.b16 %v280
        %v858 = vunpack.c.l.b16 %v281
        %v859 = vunpack.c.l.b16 %v282
        %v860 = vunpack.c.l.b16 %v283
        %v861 = vunpack.c.l.b16 %v284
        %v862 = vunpack.c.l.b16 %v285
        %v863 = vunpack.c.l.b16 %v286
        %v864 = vunpack.c.l.b16 %v287
        %v865 = vunpack.c.l.b16 %v288
        %v866 = vunpack.c.l.b16 %v289
        %v867 = vunpack.c.l.b16 %v290
        %v868 = vunpack.c.l.b16 %v291
        %v869 = vunpack.c.l.b16 %v292
        %v870 = vunpack.c.l.b16 %v293
        %v871 = vunpack.c.l.b16 %v294
        %v872 = vunpack.c.l.b16 %v295
        %v873 = vunpack.c.l.b16 %v296
        %v874 = vunpack.c.l.b16 %v297
        %v875 = vunpack.c.l.b16 %v298
        %v876 = vunpack.c.l.b16 %v299
        %v877 = vunpack.c.l.b16 %v300
        %v878 = vunpack.c.l.b16 %v301
        %v879 = vunpack.c.l.b16 %v302
        %v880 = vunpack.c.l.b16 %v303
        %v881 = vunpack.c.l.b16 %v304
        %v882 = vunpack.c.l.b16 %v305
        %v883 = vunpack.c.l.b16 %v306
        %v884 = vunpack.c.l.b16 %v307
        %v885 = vunpack.c.l.b16 %v308
        %v886 = vunpack.c.l.b16 %v309
        %v887 = vunpack.c.l.b16 %v310
        %v888 = vunpack.c.l.b16 %v311
        %v889 = vunpack.c.l.b16 %v312
        %v890 = vunpack.c.l.b16 %v313
        %v891 = vunpack.c.l.b16 %v314
        %v892 = vunpack.c.l.b16 %v315
        %v893 = vunpack.c.l.b16 %v316
        %v894 = vunpack.c.l.b16 %v317
        %v895 = vunpack.c.l.b16 %v318
        %v896 = vunpack.c.l.b16 %v319
        %v897 = vunpack.c.l.b16 %v320
        %v898 = vunpack.c.l.b16 %v321
        %v899 = vunpack.c.l.b16 %v322
        %v900 = vunpack.c.l.b16 %v323
        %v901 = vunpack.c.l.b16 %v324
        %v902 = vunpack.c.l.b16 %v325
        %v903 = vunpack.c.l.b16 %v326
        %v904 = vunpack.c.l.b16 %v327
        %v905 = vunpack.c.l.b16 %v328
        %v906 = vunpack.c.l.b16 %v329
        %v907 = vunpack.c.l.b16 %v330
        %v908 = vunpack.c.l.b16 %v331
        %v909 = vunpack.c.l.b16 %v332
        %v910 = vunpack.c.l.b16 %v333
        %v911 = vunpack.c.l.b16 %v334
        %v912 = vunpack.c.l.b16 %v335
        %v913 = vunpack.c.l.b16 %v336
        %v914 = vunpack.c.l.b16 %v337
        %v915 = vunpack.c.l.b16 %v338
        %v916 = vunpack.c.l.b16 %v339
        %v917 = vunpack.c.l.b16 %v340
        %v918 = vunpack.c.l.b16 %v341
        %v919 = vunpack.c.l.b16 %v342
        %v920 = vunpack.c.l.b16 %v343
        %v921 = vunpack.c.l.b16 %v344
        %v922 = vunpack.c.l.b16 %v345
        %v923 = vunpack.c.l.b16 %v346
        %v924 = vunpack.c.l.b16 %v347
        %v925 = vunpack.c.l.b16 %v348
        %v926 = vunpack.c.l.b16 %v349
        %v927 = vunpack.c.l.b16 %v350
        %v928 = vunpack.c.l.b16 %v351
        %v929 = vunpack.c.l.b16 %v352
        %v930 = vunpack.c.l.b16 %v353
        %v931 = vunpack.c.l.b16 %v354
        %v932 = vunpack.c.l.b16 %v355
        %v933 = vunpack.c.l.b16 %v356
        %v934 = vunpack.c.l.b16 %v357
        %v935 = vunpack.c.l.b16 %v358
        %v936 = vunpack.c.l.b16 %v359
        %v937 = vunpack.c.l.b16 %v360
        %v938 = vunpack.c.l.b16 %v361
        %v939 = vunpack.c.l.b16 %v362
        %v940 = vunpack.c.l.b16 %v363
        %v941 = vunpack.c.l.b16 %v364
        %v942 = vunpack.c.l.b16 %v365
        %v943 = vunpack.c.l.b16 %v366
        %v944 = vunpack.c.l.b16 %v367
        %v945 = vunpack.c.l.b16 %v368
        %v946 = vunpack.c.l.b16 %v369
        %v947 = vunpack.c.l.b16 %v370
        %v948 = vunpack.c.l.b16 %v371
        %v949 = vunpack.c.l.b16 %v372
        %v950 = vunpack.c.l.b16 %v373
        %v951 = vunpack.c.l.b16 %v374
        %v952 = vunpack.c.l.b16 %v375
        %v953 = vunpack.c.l.b16 %v376
        %v954 = vunpack.c.l.b16 %v377
        %v955 = vunpack.c.l.b16 %v378
        %v956 = vunpack.c.l.b16 %v379
        %v957 = vunpack.c.l.b16 %v380
        %v958 = vunpack.c.l.b16 %v381
        %v959 = vunpack.c.l.b16 %v382
        %v960 = vunpack.c.l.b16 %v383
        %v961 = vunpack.c.l.b16 %v384
        %v962 = vunpack.c.l.b16 %v385
        %v963 = vunpack.c.l.b16 %v386
        %v964 = vunpack.c.l.b16 %v387
        %v965 = vunpack.c.l.b16 %v388
        %v966 = vunpack.c.l.b16 %v389
        %v967 = vunpack.c.l.b16 %v390
        %v968 = vunpack.c.l.b16 %v391
        %v969 = vunpack.c.l.b16 %v392
        %v970 = vunpack.c.l.b16 %v393
        %v971 = vunpack.c.l.b16 %v394
        %v972 = vunpack.c.l.b16 %v395
        %v973 = vunpack.c.l.b16 %v396
        %v974 = vunpack.c.l.b16 %v397
        %v975 = vunpack.c.l.b16 %v398
        %v976 = vunpack.c.l.b16 %v399
        %v977 = vunpack.c.l.b16 %v400
        %v978 = vunpack.c.l.b16 %v401
        %v979 = vunpack.c.l.b16 %v402
        %v980 = vunpack.c.l.b16 %v403
        %v981 = vunpack.c.l.b16 %v404
        %v982 = vunpack.c.l.b16 %v405
        %v983 = vunpack.c.l.b16 %v406
        %v984 = vunpack.c.l.b16 %v407
        %v985 = vunpack.c.l.b16 %v408
        %v986 = vunpack.c.l.b16 %v409
        %v987 = vunpack.c.l.b16 %v410
        %v988 = vunpack.c.l.b16 %v411
        %v989 = vunpack.c.l.b16 %v412
        %v990 = vunpack.c.l.b16 %v413
        %v991 = vunpack.c.l.b16 %v414
        %v992 = vunpack.c.l.b16 %v415
        %v993 = vunpack.c.l.b16 %v416
        %v994 = vunpack.c.l.b16 %v417
        %v995 = vunpack.c.l.b16 %v418
        %v996 = vunpack.c.l.b16 %v419
        %v997 = vunpack.c.l.b16 %v420
        %v998 = vunpack.c.l.b16 %v421
        %v999 = vunpack.c.l.b16 %v422
        %v1000 = vunpack.c.l.b16 %v423
        %v1001 = vunpack.c.l.b16 %v424
        %v1002 = vunpack.c.l.b16 %v425
        %v1003 = vunpack.c.l.b16 %v426
        %v1004 = vunpack.c.l.b16 %v427
        %v1005 = vunpack.c.l.b16 %v428
        %v1006 = vunpack.c.l.b16 %v429
        %v1007 = vunpack.c.l.b16 %v430
        %v1008 = vunpack.c.l.b16 %v431
        %v1009 = vunpack.c.l.b16 %v432
        %v1010 = vunpack.c.l.b16 %v433
        %v1011 = vunpack.c.l.b16 %v434
        %v1012 = vunpack.c.l.b16 %v435
        %v1013 = vunpack.c.l.b16 %v436
        %v1014 = vunpack.c.l.b16 %v437
        %v1015 = vunpack.c.l.b16 %v438
        %v1016 = vunpack.c.l.b16 %v439
        %v1017 = vunpack.c.l.b16 %v440
        %v1018 = vunpack.c.l.b16 %v441
        %v1019 = vunpack.c.l.b16 %v442
        %v1020 = vunpack.c.l.b16 %v443
        %v1021 = vunpack.c.l.b16 %v444
        %v1022 = vunpack.c.l.b16 %v445
        %v1023 = vunpack.c.l.b16 %v446
        %v1024 = vunpack.c.l.b16 %v447
        %v1025 = vunpack.c.l.b16 %v448
        %v1026 = vunpack.c.l.b16 %v449
        %v1027 = vunpack.c.l.b16 %v450
        %v1028 = vunpack.c.l.b16 %v451
        %v1029 = vunpack.c.l.b16 %v452
        %v1030 = vunpack.c.l.b16 %v453
        %v1031 = vunpack.c.l.b16 %v454
        %v1032 = vunpack.c.l.b16 %v455
        %v1033 = vunpack.c.l.b16 %v456
        %v1034 = vunpack.c.l.b16 %v457
        %v1035 = vunpack.c.l.b16 %v458
        %v1036 = vunpack.c.l.b16 %v459
        %v1037 = vunpack.c.l.b16 %v460
        %v1038 = vunpack.c.l.b16 %v461
        %v1039 = vunpack.c.l.b16 %v462
        %v1040 = vunpack.c.l.b16 %v463
        %v1041 = vunpack.c.l.b16 %v464
        %v1042 = vunpack.c.l.b16 %v465
        %v1043 = vunpack.c.l.b16 %v466
        %v1044 = vunpack.c.l.b16 %v467
        %v1045 = vunpack.c.l.b16 %v468
        %v1046 = vunpack.c.l.b16 %v469
        %v1047 = vunpack.c.l.b16 %v470
        %v1048 = vunpack.c.l.b16 %v471
        %v1049 = vunpack.c.l.b16 %v472
        %v1050 = vunpack.c.l.b16 %v473
        %v1051 = vunpack.c.l.b16 %v474
        %v1052 = vunpack.c.l.b16 %v475
        %v1053 = vunpack.c.l.b16 %v476
        %v1054 = vunpack.c.l.b16 %v477
        %v1055 = vunpack.c.l.b16 %v478
        %v1056 = vunpack.c.l.b16 %v479
        %v1057 = vunpack.c.l.b16 %v480
        %v1058 = vunpack.c.l.b16 %v481
        %v1059 = vunpack.c.l.b16 %v482
        %v1060 = vunpack.c.l.b16 %v483
        %v1061 = vunpack.c.l.b16 %v484
        %v1062 = vunpack.c.l.b16 %v485
        %v1063 = vunpack.c.l.b16 %v486
        %v1064 = vunpack.c.l.b16 %v487
        %v1065 = vunpack.c.l.b16 %v488
        %v1066 = vunpack.c.l.b16 %v489
        %v1067 = vunpack.c.l.b16 %v490
        %v1068 = vunpack.c.l.b16 %v491
        %v1069 = vunpack.c.l.b16 %v492
        %v1070 = vunpack.c.l.b16 %v493
        %v1071 = vunpack.c.l.b16 %v494
        %v1072 = vunpack.c.l.b16 %v495
        %v1073 = vunpack.c.l.b16 %v496
        %v1074 = vunpack.c.l.b16 %v497
        %v1075 = vunpack.c.l.b16 %v498
        %v1076 = vunpack.c.l.b16 %v499
        %v1077 = vunpack.c.l.b16 %v500
        %v1078 = vunpack.c.l.b16 %v501
        %v1079 = vunpack.c.l.b16 %v502
        %v1080 = vunpack.c.l.b16 %v503
        %v1081 = vunpack.c.l.b16 %v504
        %v1082 = vunpack.c.l.b16 %v505
        %v1083 = vunpack.c.l.b16 %v506
        %v1084 = vunpack.c.l.b16 %v507
        %v1085 = vunpack.c.l.b16 %v508
        %v1086 = vunpack.c.l.b16 %v509
        %v1087 = vunpack.c.l.b16 %v510
        %v1088 = vunpack.c.l.b16 %v511
        %v1089 = vunpack.c.l.b16 %v512
        %v1090 = vunpack.c.l.b16 %v513
        %v1091 = vunpack.c.l.b16 %v514
        %v1092 = vunpack.c.l.b16 %v515
        %v1093 = vunpack.c.l.b16 %v516
        %v1094 = vunpack.c.l.b16 %v517
        %v1095 = vunpack.c.l.b16 %v518
        %v1096 = vunpack.c.l.b16 %v519
        %v1097 = vunpack.c.l.b16 %v520
        %v1098 = vunpack.c.l.b16 %v521
        %v1099 = vunpack.c.l.b16 %v522
        %v1100 = vunpack.c.l.b16 %v523
        %v1101 = vunpack.c.l.b16 %v524
        %v1102 = vunpack.c.l.b16 %v525
        %v1103 = vunpack.c.l.b16 %v526
        %v1104 = vpack.c.b16 %v849, %v848
        %v1105 = vpack.c.b16 %v851, %v850
        %v1106 = vpack.c.b16 %v853, %v852
        %v1107 = vpack.c.b16 %v855, %v854
        %v1108 = vpack.c.b16 %v857, %v856
        %v1109 = vpack.c.b16 %v859, %v858
        %v1110 = vpack.c.b16 %v861, %v860
        %v1111 = vpack.c.b16 %v863, %v862
        %v1112 = vpack.c.b16 %v865, %v864
        %v1113 = vpack.c.b16 %v867, %v866
        %v1114 = vpack.c.b16 %v869, %v868
        %v1115 = vpack.c.b16 %v871, %v870
        %v1116 = vpack.c.b16 %v873, %v872
        %v1117 = vpack.c.b16 %v875, %v874
        %v1118 = vpack.c.b16 %v877, %v876
        %v1119 = vpack.c.b16 %v879, %v878
        %v1120 = vpack.c.b16 %v881, %v880
        %v1121 = vpack.c.b16 %v883, %v882
        %v1122 = vpack.c.b16 %v885, %v884
        %v1123 = vpack.c.b16 %v887, %v886
        %v1124 = vpack.c.b16 %v889, %v888
        %v1125 = vpack.c.b16 %v891, %v890
        %v1126 = vpack.c.b16 %v893, %v892
        %v1127 = vpack.c.b16 %v895, %v894
        %v1128 = vpack.c.b16 %v897, %v896
        %v1129 = vpack.c.b16 %v899, %v898
        %v1130 = vpack.c.b16 %v901, %v900
        %v1131 = vpack.c.b16 %v903, %v902
        %v1132 = vpack.c.b16 %v905, %v904
        %v1133 = vpack.c.b16 %v907, %v906
        %v1134 = vpack.c.b16 %v909, %v908
        %v1135 = vpack.c.b16 %v911, %v910
        %v1136 = vpack.c.b16 %v913, %v912
        %v1137 = vpack.c.b16 %v915, %v914
        %v1138 = vpack.c.b16 %v917, %v916
        %v1139 = vpack.c.b16 %v919, %v918
        %v1140 = vpack.c.b16 %v921, %v920
        %v1141 = vpack.c.b16 %v923, %v922
        %v1142 = vpack.c.b16 %v925, %v924
        %v1143 = vpack.c.b16 %v927, %v926
        %v1144 = vpack.c.b16 %v929, %v928
        %v1145 = vpack.c.b16 %v931, %v930
        %v1146 = vpack.c.b16 %v933, %v932
        %v1147 = vpack.c.b16 %v935, %v934
        %v1148 = vpack.c.b16 %v937, %v936
        %v1149 = vpack.c.b16 %v939, %v938
        %v1150 = vpack.c.b16 %v941, %v940
        %v1151 = vpack.c.b16 %v943, %v942
        %v1152 = vpack.c.b16 %v945, %v944
        %v1153 = vpack.c.b16 %v947, %v946
        %v1154 = vpack.c.b16 %v949, %v948
        %v1155 = vpack.c.b16 %v951, %v950
        %v1156 = vpack.c.b16 %v953, %v952
        %v1157 = vpack.c.b16 %v955, %v954
        %v1158 = vpack.c.b16 %v957, %v956
        %v1159 = vpack.c.b16 %v959, %v958
        %v1160 = vpack.c.b16 %v961, %v960
        %v1161 = vpack.c.b16 %v963, %v962
        %v1162 = vpack.c.b16 %v965, %v964
        %v1163 = vpack.c.b16 %v967, %v966
        %v1164 = vpack.c.b16 %v969, %v968
        %v1165 = vpack.c.b16 %v971, %v970
        %v1166 = vpack.c.b16 %v973, %v972
        %v1167 = vpack.c.b16 %v975, %v974
        %v1168 = vpack.c.b16 %v977, %v976
        %v1169 = vpack.c.b16 %v979, %v978
        %v1170 = vpack.c.b16 %v981, %v980
        %v1171 = vpack.c.b16 %v983, %v982
        %v1172 = vpack.c.b16 %v985, %v984
        %v1173 = vpack.c.b16 %v987, %v986
        %v1174 = vpack.c.b16 %v989, %v988
        %v1175 = vpack.c.b16 %v991, %v990
        %v1176 = vpack.c.b16 %v993, %v992
        %v1177 = vpack.c.b16 %v995, %v994
        %v1178 = vpack.c.b16 %v997, %v996
        %v1179 = vpack.c.b16 %v999, %v998
        %v1180 = vpack.c.b16 %v1001, %v1000
        %v1181 = vpack.c.b16 %v1003, %v1002
        %v1182 = vpack.c.b16 %v1005, %v1004
        %v1183 = vpack.c.b16 %v1007, %v1006
        %v1184 = vpack.c.b16 %v1009, %v1008
        %v1185 = vpack.c.b16 %v1011, %v1010
        %v1186 = vpack.c.b16 %v1013, %v1012
        %v1187 = vpack.c.b16 %v1015, %v1014
        %v1188 = vpack.c.b16 %v1017, %v1016
        %v1189 = vpack.c.b16 %v1019, %v1018
        %v1190 = vpack.c.b16 %v1021, %v1020
        %v1191 = vpack.c.b16 %v1023, %v1022
        %v1192 = vpack.c.b16 %v1025, %v1024
        %v1193 = vpack.c.b16 %v1027, %v1026
        %v1194 = vpack.c.b16 %v1029, %v1028
        %v1195 = vpack.c.b16 %v1031, %v1030
        %v1196 = vpack.c.b16 %v1033, %v1032
        %v1197 = vpack.c.b16 %v1035, %v1034
        %v1198 = vpack.c.b16 %v1037, %v1036
        %v1199 = vpack.c.b16 %v1039, %v1038
        %v1200 = vpack.c.b16 %v1041, %v1040
        %v1201 = vpack.c.b16 %v1043, %v1042
        %v1202 = vpack.c.b16 %v1045, %v1044
        %v1203 = vpack.c.b16 %v1047, %v1046
        %v1204 = vpack.c.b16 %v1049, %v1048
        %v1205 = vpack.c.b16 %v1051, %v1050
        %v1206 = vpack.c.b16 %v1053, %v1052
        %v1207 = vpack.c.b16 %v1055, %v1054
        %v1208 = vpack.c.b16 %v1057, %v1056
        %v1209 = vpack.c.b16 %v1059, %v1058
        %v1210 = vpack.c.b16 %v1061, %v1060
        %v1211 = vpack.c.b16 %v1063, %v1062
        %v1212 = vpack.c.b16 %v1065, %v1064
        %v1213 = vpack.c.b16 %v1067, %v1066
        %v1214 = vpack.c.b16 %v1069, %v1068
        %v1215 = vpack.c.b16 %v1071, %v1070
        %v1216 = vpack.c.b16 %v1073, %v1072
        %v1217 = vpack.c.b16 %v1075, %v1074
        %v1218 = vpack.c.b16 %v1077, %v1076
        %v1219 = vpack.c.b16 %v1079, %v1078
        %v1220 = vpack.c.b16 %v1081, %v1080
        %v1221 = vpack.c.b16 %v1083, %v1082
        %v1222 = vpack.c.b16 %v1085, %v1084
        %v1223 = vpack.c.b16 %v1087, %v1086
        %v1224 = vpack.c.b16 %v1089, %v1088
        %v1225 = vpack.c.b16 %v1091, %v1090
        %v1226 = vpack.c.b16 %v1093, %v1092
        %v1227 = vpack.c.b16 %v1095, %v1094
        %v1228 = vpack.c.b16 %v1097, %v1096
        %v1229 = vpack.c.b16 %v1099, %v1098
        %v1230 = vpack.c.b16 %v1101, %v1100
        %v1231 = vpack.c.b16 %v1103, %v1102
        %1360 = vmatprep.subr.bf16.mxu0 0
        %1361 = vmatpush1.bf16.msra.mxu0 %v1104
        %1362 = vmatprep.subr.bf16.mxu0 0
        %1363 = vmatpush1.bf16.msra.mxu0 %v1105
        %1364 = vmatprep.subr.bf16.mxu0 0
        %1365 = vmatpush1.bf16.msra.mxu0 %v1106
        %1366 = vmatprep.subr.bf16.mxu0 0
        %1367 = vmatpush1.bf16.msra.mxu0 %v1107
        %1368 = vmatprep.subr.bf16.mxu0 0
        %1369 = vmatpush1.bf16.msra.mxu0 %v1108
        %1370 = vmatprep.subr.bf16.mxu0 0
        %1371 = vmatpush1.bf16.msra.mxu0 %v1109
        %1372 = vmatprep.subr.bf16.mxu0 0
        %1373 = vmatpush1.bf16.msra.mxu0 %v1110
        %1374 = vmatprep.subr.bf16.mxu0 0
        %1375 = vmatpush1.bf16.msra.mxu0 %v1111
        %1376 = vmatprep.subr.bf16.mxu0 0
        %1377 = vmatpush1.bf16.msra.mxu0 %v1112
        %1378 = vmatprep.subr.bf16.mxu0 0
        %1379 = vmatpush1.bf16.msra.mxu0 %v1113
        %1380 = vmatprep.subr.bf16.mxu0 0
        %1381 = vmatpush1.bf16.msra.mxu0 %v1114
        %1382 = vmatprep.subr.bf16.mxu0 0
        %1383 = vmatpush1.bf16.msra.mxu0 %v1115
        %1384 = vmatprep.subr.bf16.mxu0 0
        %1385 = vmatpush1.bf16.msra.mxu0 %v1116
        %1386 = vmatprep.subr.bf16.mxu0 0
        %1387 = vmatpush1.bf16.msra.mxu0 %v1117
        %1388 = vmatprep.subr.bf16.mxu0 0
        %1389 = vmatpush1.bf16.msra.mxu0 %v1118
        %1390 = vmatprep.subr.bf16.mxu0 0
        %1391 = vmatpush1.bf16.msra.mxu0 %v1119
        %1392 = vmatprep.mubr.bf16.mxu0 %v561
        %1393 = vmatmul.mubr.bf16.gmra.mrb[0].mxu0 %v560
        %v1394 = vpop.f32.mrb[0].mxu0
        %v1395 = vadd.f32 0.0, %v1394
        %v1396 = vpop.f32.mrb[0].mxu0
        %v1397 = vpop.f32.mrb[0].mxu0
        %v1398 = vpop.f32.mrb[0].mxu0
        %1399 = vdwg.mxu0
        %1400 = vmatprep.subr.bf16.mxu0 0
        %1401 = vmatpush1.bf16.msra.mxu0 %v1120
        %1402 = vmatprep.subr.bf16.mxu0 0
        %1403 = vmatpush1.bf16.msra.mxu0 %v1121
        %1404 = vmatprep.subr.bf16.mxu0 0
        %1405 = vmatpush1.bf16.msra.mxu0 %v1122
        %1406 = vmatprep.subr.bf16.mxu0 0
        %1407 = vmatpush1.bf16.msra.mxu0 %v1123
        %1408 = vmatprep.subr.bf16.mxu0 0
        %1409 = vmatpush1.bf16.msra.mxu0 %v1124
        %1410 = vmatprep.subr.bf16.mxu0 0
        %1411 = vmatpush1.bf16.msra.mxu0 %v1125
        %1412 = vmatprep.subr.bf16.mxu0 0
        %1413 = vmatpush1.bf16.msra.mxu0 %v1126
        %1414 = vmatprep.subr.bf16.mxu0 0
        %1415 = vmatpush1.bf16.msra.mxu0 %v1127
        %1416 = vmatprep.subr.bf16.mxu0 0
        %1417 = vmatpush1.bf16.msra.mxu0 %v1128
        %1418 = vmatprep.subr.bf16.mxu0 0
        %1419 = vmatpush1.bf16.msra.mxu0 %v1129
        %1420 = vmatprep.subr.bf16.mxu0 0
        %1421 = vmatpush1.bf16.msra.mxu0 %v1130
        %1422 = vmatprep.subr.bf16.mxu0 0
        %1423 = vmatpush1.bf16.msra.mxu0 %v1131
        %1424 = vmatprep.subr.bf16.mxu0 0
        %1425 = vmatpush1.bf16.msra.mxu0 %v1132
        %1426 = vmatprep.subr.bf16.mxu0 0
        %1427 = vmatpush1.bf16.msra.mxu0 %v1133
        %1428 = vmatprep.subr.bf16.mxu0 0
        %1429 = vmatpush1.bf16.msra.mxu0 %v1134
        %1430 = vmatprep.subr.bf16.mxu0 0
        %1431 = vmatpush1.bf16.msra.mxu0 %v1135
        %1432 = vmatprep.mubr.bf16.mxu0 %v563
        %1433 = vmatmul.mubr.bf16.gmra.mrb[0].mxu0 %v562
        %v1434 = vpop.f32.mrb[0].mxu0
        %v1435 = vadd.f32 %v1395, %v1434
        %v1436 = vpop.f32.mrb[0].mxu0
        %v1437 = vpop.f32.mrb[0].mxu0
        %v1438 = vpop.f32.mrb[0].mxu0
        %1439 = vdwg.mxu0
        %1440 = vmatprep.subr.bf16.mxu0 0
        %1441 = vmatpush1.bf16.msra.mxu0 %v1136
        %1442 = vmatprep.subr.bf16.mxu0 0
        %1443 = vmatpush1.bf16.msra.mxu0 %v1137
        %1444 = vmatprep.subr.bf16.mxu0 0
        %1445 = vmatpush1.bf16.msra.mxu0 %v1138
        %1446 = vmatprep.subr.bf16.mxu0 0
        %1447 = vmatpush1.bf16.msra.mxu0 %v1139
        %1448 = vmatprep.subr.bf16.mxu0 0
        %1449 = vmatpush1.bf16.msra.mxu0 %v1140
        %1450 = vmatprep.subr.bf16.mxu0 0
        %1451 = vmatpush1.bf16.msra.mxu0 %v1141
        %1452 = vmatprep.subr.bf16.mxu0 0
        %1453 = vmatpush1.bf16.msra.mxu0 %v1142
        %1454 = vmatprep.subr.bf16.mxu0 0
        %1455 = vmatpush1.bf16.msra.mxu0 %v1143
        %1456 = vmatprep.subr.bf16.mxu0 0
        %1457 = vmatpush1.bf16.msra.mxu0 %v1144
        %1458 = vmatprep.subr.bf16.mxu0 0
        %1459 = vmatpush1.bf16.msra.mxu0 %v1145
        %1460 = vmatprep.subr.bf16.mxu0 0
        %1461 = vmatpush1.bf16.msra.mxu0 %v1146
        %1462 = vmatprep.subr.bf16.mxu0 0
        %1463 = vmatpush1.bf16.msra.mxu0 %v1147
        %1464 = vmatprep.subr.bf16.mxu0 0
        %1465 = vmatpush1.bf16.msra.mxu0 %v1148
        %1466 = vmatprep.subr.bf16.mxu0 0
        %1467 = vmatpush1.bf16.msra.mxu0 %v1149
        %1468 = vmatprep.subr.bf16.mxu0 0
        %1469 = vmatpush1.bf16.msra.mxu0 %v1150
        %1470 = vmatprep.subr.bf16.mxu0 0
        %1471 = vmatpush1.bf16.msra.mxu0 %v1151
        %1472 = vmatprep.mubr.bf16.mxu0 %v565
        %1473 = vmatmul.mubr.bf16.gmra.mrb[0].mxu0 %v564
        %v1474 = vpop.f32.mrb[0].mxu0
        %v1475 = vadd.f32 %v1435, %v1474
        %v1476 = vpop.f32.mrb[0].mxu0
        %v1477 = vpop.f32.mrb[0].mxu0
        %v1478 = vpop.f32.mrb[0].mxu0
        %1479 = vdwg.mxu0
        %1480 = vmatprep.subr.bf16.mxu0 0
        %1481 = vmatpush1.bf16.msra.mxu0 %v1152
        %1482 = vmatprep.subr.bf16.mxu0 0
        %1483 = vmatpush1.bf16.msra.mxu0 %v1153
        %1484 = vmatprep.subr.bf16.mxu0 0
        %1485 = vmatpush1.bf16.msra.mxu0 %v1154
        %1486 = vmatprep.subr.bf16.mxu0 0
        %1487 = vmatpush1.bf16.msra.mxu0 %v1155
        %1488 = vmatprep.subr.bf16.mxu0 0
        %1489 = vmatpush1.bf16.msra.mxu0 %v1156
        %1490 = vmatprep.subr.bf16.mxu0 0
        %1491 = vmatpush1.bf16.msra.mxu0 %v1157
        %1492 = vmatprep.subr.bf16.mxu0 0
        %1493 = vmatpush1.bf16.msra.mxu0 %v1158
        %1494 = vmatprep.subr.bf16.mxu0 0
        %1495 = vmatpush1.bf16.msra.mxu0 %v1159
        %1496 = vmatprep.subr.bf16.mxu0 0
        %1497 = vmatpush1.bf16.msra.mxu0 %v1160
        %1498 = vmatprep.subr.bf16.mxu0 0
        %1499 = vmatpush1.bf16.msra.mxu0 %v1161
        %1500 = vmatprep.subr.bf16.mxu0 0
        %1501 = vmatpush1.bf16.msra.mxu0 %v1162
        %1502 = vmatprep.subr.bf16.mxu0 0
        %1503 = vmatpush1.bf16.msra.mxu0 %v1163
        %1504 = vmatprep.subr.bf16.mxu0 0
        %1505 = vmatpush1.bf16.msra.mxu0 %v1164
        %1506 = vmatprep.subr.bf16.mxu0 0
        %1507 = vmatpush1.bf16.msra.mxu0 %v1165
        %1508 = vmatprep.subr.bf16.mxu0 0
        %1509 = vmatpush1.bf16.msra.mxu0 %v1166
        %1510 = vmatprep.subr.bf16.mxu0 0
        %1511 = vmatpush1.bf16.msra.mxu0 %v1167
        %1512 = vmatprep.mubr.bf16.mxu0 %v567
        %1513 = vmatmul.mubr.bf16.gmra.mrb[0].mxu0 %v566
        %v1514 = vpop.f32.mrb[0].mxu0
        %v1515 = vadd.f32 %v1475, %v1514
        %v1516 = vpop.f32.mrb[0].mxu0
        %v1517 = vpop.f32.mrb[0].mxu0
        %v1518 = vpop.f32.mrb[0].mxu0
        %1519 = vdwg.mxu0
        %1520 = vmatprep.subr.bf16.mxu0 0
        %1521 = vmatpush1.bf16.msra.mxu0 %v1168
        %1522 = vmatprep.subr.bf16.mxu0 0
        %1523 = vmatpush1.bf16.msra.mxu0 %v1169
        %1524 = vmatprep.subr.bf16.mxu0 0
        %1525 = vmatpush1.bf16.msra.mxu0 %v1170
        %1526 = vmatprep.subr.bf16.mxu0 0
        %1527 = vmatpush1.bf16.msra.mxu0 %v1171
        %1528 = vmatprep.subr.bf16.mxu0 0
        %1529 = vmatpush1.bf16.msra.mxu0 %v1172
        %1530 = vmatprep.subr.bf16.mxu0 0
        %1531 = vmatpush1.bf16.msra.mxu0 %v1173
        %1532 = vmatprep.subr.bf16.mxu0 0
        %1533 = vmatpush1.bf16.msra.mxu0 %v1174
        %1534 = vmatprep.subr.bf16.mxu0 0
        %1535 = vmatpush1.bf16.msra.mxu0 %v1175
        %1536 = vmatprep.subr.bf16.mxu0 0
        %1537 = vmatpush1.bf16.msra.mxu0 %v1176
        %1538 = vmatprep.subr.bf16.mxu0 0
        %1539 = vmatpush1.bf16.msra.mxu0 %v1177
        %1540 = vmatprep.subr.bf16.mxu0 0
        %1541 = vmatpush1.bf16.msra.mxu0 %v1178
        %1542 = vmatprep.subr.bf16.mxu0 0
        %1543 = vmatpush1.bf16.msra.mxu0 %v1179
        %1544 = vmatprep.subr.bf16.mxu0 0
        %1545 = vmatpush1.bf16.msra.mxu0 %v1180
        %1546 = vmatprep.subr.bf16.mxu0 0
        %1547 = vmatpush1.bf16.msra.mxu0 %v1181
        %1548 = vmatprep.subr.bf16.mxu0 0
        %1549 = vmatpush1.bf16.msra.mxu0 %v1182
        %1550 = vmatprep.subr.bf16.mxu0 0
        %1551 = vmatpush1.bf16.msra.mxu0 %v1183
        %1552 = vmatprep.mubr.bf16.mxu0 %v569
        %1553 = vmatmul.mubr.bf16.gmra.mrb[0].mxu0 %v568
        %v1554 = vpop.f32.mrb[0].mxu0
        %v1555 = vadd.f32 %v1515, %v1554
        %v1556 = vpop.f32.mrb[0].mxu0
        %v1557 = vpop.f32.mrb[0].mxu0
        %v1558 = vpop.f32.mrb[0].mxu0
        %1559 = vdwg.mxu0
        %1560 = vmatprep.subr.bf16.mxu0 0
        %1561 = vmatpush1.bf16.msra.mxu0 %v1184
        %1562 = vmatprep.subr.bf16.mxu0 0
        %1563 = vmatpush1.bf16.msra.mxu0 %v1185
        %1564 = vmatprep.subr.bf16.mxu0 0
        %1565 = vmatpush1.bf16.msra.mxu0 %v1186
        %1566 = vmatprep.subr.bf16.mxu0 0
        %1567 = vmatpush1.bf16.msra.mxu0 %v1187
        %1568 = vmatprep.subr.bf16.mxu0 0
        %1569 = vmatpush1.bf16.msra.mxu0 %v1188
        %1570 = vmatprep.subr.bf16.mxu0 0
        %1571 = vmatpush1.bf16.msra.mxu0 %v1189
        %1572 = vmatprep.subr.bf16.mxu0 0
        %1573 = vmatpush1.bf16.msra.mxu0 %v1190
        %1574 = vmatprep.subr.bf16.mxu0 0
        %1575 = vmatpush1.bf16.msra.mxu0 %v1191
        %1576 = vmatprep.subr.bf16.mxu0 0
        %1577 = vmatpush1.bf16.msra.mxu0 %v1192
        %1578 = vmatprep.subr.bf16.mxu0 0
        %1579 = vmatpush1.bf16.msra.mxu0 %v1193
        %1580 = vmatprep.subr.bf16.mxu0 0
        %1581 = vmatpush1.bf16.msra.mxu0 %v1194
        %1582 = vmatprep.subr.bf16.mxu0 0
        %1583 = vmatpush1.bf16.msra.mxu0 %v1195
        %1584 = vmatprep.subr.bf16.mxu0 0
        %1585 = vmatpush1.bf16.msra.mxu0 %v1196
        %1586 = vmatprep.subr.bf16.mxu0 0
        %1587 = vmatpush1.bf16.msra.mxu0 %v1197
        %1588 = vmatprep.subr.bf16.mxu0 0
        %1589 = vmatpush1.bf16.msra.mxu0 %v1198
        %1590 = vmatprep.subr.bf16.mxu0 0
        %1591 = vmatpush1.bf16.msra.mxu0 %v1199
        %1592 = vmatprep.mubr.bf16.mxu0 %v571
        %1593 = vmatmul.mubr.bf16.gmra.mrb[0].mxu0 %v570
        %v1594 = vpop.f32.mrb[0].mxu0
        %v1595 = vadd.f32 %v1555, %v1594
        %v1596 = vpop.f32.mrb[0].mxu0
        %v1597 = vpop.f32.mrb[0].mxu0
        %v1598 = vpop.f32.mrb[0].mxu0
        %1599 = vdwg.mxu0
        %1600 = vmatprep.subr.bf16.mxu0 0
        %1601 = vmatpush1.bf16.msra.mxu0 %v1200
        %1602 = vmatprep.subr.bf16.mxu0 0
        %1603 = vmatpush1.bf16.msra.mxu0 %v1201
        %1604 = vmatprep.subr.bf16.mxu0 0
        %1605 = vmatpush1.bf16.msra.mxu0 %v1202
        %1606 = vmatprep.subr.bf16.mxu0 0
        %1607 = vmatpush1.bf16.msra.mxu0 %v1203
        %1608 = vmatprep.subr.bf16.mxu0 0
        %1609 = vmatpush1.bf16.msra.mxu0 %v1204
        %1610 = vmatprep.subr.bf16.mxu0 0
        %1611 = vmatpush1.bf16.msra.mxu0 %v1205
        %1612 = vmatprep.subr.bf16.mxu0 0
        %1613 = vmatpush1.bf16.msra.mxu0 %v1206
        %1614 = vmatprep.subr.bf16.mxu0 0
        %1615 = vmatpush1.bf16.msra.mxu0 %v1207
        %1616 = vmatprep.subr.bf16.mxu0 0
        %1617 = vmatpush1.bf16.msra.mxu0 %v1208
        %1618 = vmatprep.subr.bf16.mxu0 0
        %1619 = vmatpush1.bf16.msra.mxu0 %v1209
        %1620 = vmatprep.subr.bf16.mxu0 0
        %1621 = vmatpush1.bf16.msra.mxu0 %v1210
        %1622 = vmatprep.subr.bf16.mxu0 0
        %1623 = vmatpush1.bf16.msra.mxu0 %v1211
        %1624 = vmatprep.subr.bf16.mxu0 0
        %1625 = vmatpush1.bf16.msra.mxu0 %v1212
        %1626 = vmatprep.subr.bf16.mxu0 0
        %1627 = vmatpush1.bf16.msra.mxu0 %v1213
        %1628 = vmatprep.subr.bf16.mxu0 0
        %1629 = vmatpush1.bf16.msra.mxu0 %v1214
        %1630 = vmatprep.subr.bf16.mxu0 0
        %1631 = vmatpush1.bf16.msra.mxu0 %v1215
        %1632 = vmatprep.mubr.bf16.mxu0 %v573
        %1633 = vmatmul.mubr.bf16.gmra.mrb[0].mxu0 %v572
        %v1634 = vpop.f32.mrb[0].mxu0
        %v1635 = vadd.f32 %v1595, %v1634
        %v1636 = vpop.f32.mrb[0].mxu0
        %v1637 = vpop.f32.mrb[0].mxu0
        %v1638 = vpop.f32.mrb[0].mxu0
        %1639 = vdwg.mxu0
        %1640 = vmatprep.subr.bf16.mxu0 0
        %1641 = vmatpush1.bf16.msra.mxu0 %v1216
        %1642 = vmatprep.subr.bf16.mxu0 0
        %1643 = vmatpush1.bf16.msra.mxu0 %v1217
        %1644 = vmatprep.subr.bf16.mxu0 0
        %1645 = vmatpush1.bf16.msra.mxu0 %v1218
        %1646 = vmatprep.subr.bf16.mxu0 0
        %1647 = vmatpush1.bf16.msra.mxu0 %v1219
        %1648 = vmatprep.subr.bf16.mxu0 0
        %1649 = vmatpush1.bf16.msra.mxu0 %v1220
        %1650 = vmatprep.subr.bf16.mxu0 0
        %1651 = vmatpush1.bf16.msra.mxu0 %v1221
        %1652 = vmatprep.subr.bf16.mxu0 0
        %1653 = vmatpush1.bf16.msra.mxu0 %v1222
        %1654 = vmatprep.subr.bf16.mxu0 0
        %1655 = vmatpush1.bf16.msra.mxu0 %v1223
        %1656 = vmatprep.subr.bf16.mxu0 0
        %1657 = vmatpush1.bf16.msra.mxu0 %v1224
        %1658 = vmatprep.subr.bf16.mxu0 0
        %1659 = vmatpush1.bf16.msra.mxu0 %v1225
        %1660 = vmatprep.subr.bf16.mxu0 0
        %1661 = vmatpush1.bf16.msra.mxu0 %v1226
        %1662 = vmatprep.subr.bf16.mxu0 0
        %1663 = vmatpush1.bf16.msra.mxu0 %v1227
        %1664 = vmatprep.subr.bf16.mxu0 0
        %1665 = vmatpush1.bf16.msra.mxu0 %v1228
        %1666 = vmatprep.subr.bf16.mxu0 0
        %1667 = vmatpush1.bf16.msra.mxu0 %v1229
        %1668 = vmatprep.subr.bf16.mxu0 0
        %1669 = vmatpush1.bf16.msra.mxu0 %v1230
        %1670 = vmatprep.subr.bf16.mxu0 0
        %1671 = vmatpush1.bf16.msra.mxu0 %v1231
        %1672 = vmatprep.mubr.bf16.mxu0 %v575
        %1673 = vmatmul.mubr.bf16.gmra.mrb[0].mxu0 %v574
        %v1674 = vpop.f32.mrb[0].mxu0
        %v1675 = vadd.f32 %v1635, %v1674
        %v1676 = vpop.f32.mrb[0].mxu0
        %v1677 = vpop.f32.mrb[0].mxu0
        %v1678 = vpop.f32.mrb[0].mxu0
        %1679 = vdwg.mxu0
        %v1680 = vadd.f32 %v527, %v1675
        %1681 = vst [vmem:[#allocation2] sm:$0xff] %v1680
        %p1682 = scmp.eq.s32.totalorder %s25, 1
        // Predicated region
        $region53: #{tpu_custom_call.1} parent=35 // pred_check
          %p1683 = pneg %p1682
        $region54: #{tpu_custom_call.1} parent=35 // pred_check_branch
          %1685 = sbr.rel (%p1683) target = $region56
        $region55: #{tpu_custom_call.1} parent=35 // pred_region
          %v1686 = vld [vmem:[#allocation2] sm:$0xff]
          %v1687 = vmul.f32 %v1686, %v1686
          %1688 = vadd.xlane.f32.xlu0 %v1687
          %v1689 = vpop.xlane.xlu0 %1688
          %v1690 = vmax.f32 %v1689, 1e-24
          %v1691 = vrsqrt.pop %v1690
          %v1692 = vpack.c.bf16 %v1686, %v1686
          %v1693 = vld [vmem:[#allocation8] sm:$0xf]
          %v1694 = vld [vmem:[#allocation8 + $0x4] sm:$0xf]
          %v1695 = vld [vmem:[#allocation8 + $0x8] sm:$0xf]
          %v1696 = vld [vmem:[#allocation8 + $0xc] sm:$0xf]
          %v1697 = vld [vmem:[#allocation8 + $0x10] sm:$0xf]
          %v1698 = vld [vmem:[#allocation8 + $0x14] sm:$0xf]
          %v1699 = vld [vmem:[#allocation8 + $0x18] sm:$0xf]
          %v1700 = vld [vmem:[#allocation8 + $0x1c] sm:$0xf]
          %v1701 = vld [vmem:[#allocation8 + $0x20] sm:$0xf]
          %v1702 = vld [vmem:[#allocation8 + $0x24] sm:$0xf]
          %v1703 = vld [vmem:[#allocation8 + $0x28] sm:$0xf]
          %v1704 = vld [vmem:[#allocation8 + $0x2c] sm:$0xf]
          %v1705 = vld [vmem:[#allocation8 + $0x30] sm:$0xf]
          %v1706 = vld [vmem:[#allocation8 + $0x34] sm:$0xf]
          %v1707 = vld [vmem:[#allocation8 + $0x38] sm:$0xf]
          %v1708 = vld [vmem:[#allocation8 + $0x3c] sm:$0xf]
          %v1725 = vunpack.c.l.b16 %v1693
          %v1726 = vunpack.c.l.b16 %v1694
          %v1727 = vunpack.c.l.b16 %v1695
          %v1728 = vunpack.c.l.b16 %v1696
          %v1729 = vunpack.c.l.b16 %v1697
          %v1730 = vunpack.c.l.b16 %v1698
          %v1731 = vunpack.c.l.b16 %v1699
          %v1732 = vunpack.c.l.b16 %v1700
          %v1733 = vunpack.c.l.b16 %v1701
          %v1734 = vunpack.c.l.b16 %v1702
          %v1735 = vunpack.c.l.b16 %v1703
          %v1736 = vunpack.c.l.b16 %v1704
          %v1737 = vunpack.c.l.b16 %v1705
          %v1738 = vunpack.c.l.b16 %v1706
          %v1739 = vunpack.c.l.b16 %v1707
          %v1740 = vunpack.c.l.b16 %v1708
          %v1741 = vpack.c.b16 %v1726, %v1725
          %v1742 = vpack.c.b16 %v1728, %v1727
          %v1743 = vpack.c.b16 %v1730, %v1729
          %v1744 = vpack.c.b16 %v1732, %v1731
          %v1745 = vpack.c.b16 %v1734, %v1733
          %v1746 = vpack.c.b16 %v1736, %v1735
          %v1747 = vpack.c.b16 %v1738, %v1737
          %v1748 = vpack.c.b16 %v1740, %v1739
          %1757 = vmatprep.subr.bf16.mxu0 0
          %1758 = vmatpush1.bf16.msra.mxu0 %v1741
          %1759 = vmatprep.subr.bf16.mxu0 0
          %1760 = vmatpush1.bf16.msra.mxu0 %v1742
          %1761 = vmatprep.subr.bf16.mxu0 0
          %1762 = vmatpush1.bf16.msra.mxu0 %v1743
          %1763 = vmatprep.subr.bf16.mxu0 0
          %1764 = vmatpush1.bf16.msra.mxu0 %v1744
          %1765 = vmatprep.subr.bf16.mxu0 0
          %1766 = vmatpush1.bf16.msra.mxu0 %v1745
          %1767 = vmatprep.subr.bf16.mxu0 0
          %1768 = vmatpush1.bf16.msra.mxu0 %v1746
          %1769 = vmatprep.subr.bf16.mxu0 0
          %1770 = vmatpush1.bf16.msra.mxu0 %v1747
          %1771 = vmatprep.subr.bf16.mxu0 0
          %1772 = vmatpush1.bf16.msra.mxu0 %v1748
          %1773 = vmatprep.subr.bf16.mxu0 0
          %1774 = vmatpush1.bf16.msra.mxu0 0
          %1775 = vmatprep.subr.bf16.mxu0 0
          %1776 = vmatpush1.bf16.msra.mxu0 0
          %1777 = vmatprep.subr.bf16.mxu0 0
          %1778 = vmatpush1.bf16.msra.mxu0 0
          %1779 = vmatprep.subr.bf16.mxu0 0
          %1780 = vmatpush1.bf16.msra.mxu0 0
          %1781 = vmatprep.subr.bf16.mxu0 0
          %1782 = vmatpush1.bf16.msra.mxu0 0
          %1783 = vmatprep.subr.bf16.mxu0 0
          %1784 = vmatpush1.bf16.msra.mxu0 0
          %1785 = vmatprep.subr.bf16.mxu0 0
          %1786 = vmatpush1.bf16.msra.mxu0 0
          %1787 = vmatprep.subr.bf16.mxu0 0
          %1788 = vmatpush1.bf16.msra.mxu0 0
          %1789 = vmatprep.mubr.bf16.mxu0 0
          %1790 = vmatmul.mubr.bf16.gmra.mrb[0].mxu0 %v1692
          %v1791 = vpop.f32.mrb[0].mxu0
          %v1792 = vadd.f32 0.0, %v1791
          %v1793 = vpop.f32.mrb[0].mxu0
          %v1794 = vpop.f32.mrb[0].mxu0
          %v1795 = vpop.f32.mrb[0].mxu0
          %1796 = vdwg.mxu0
          %v1797 = vmul.f32 %v1792, %v1691
          %1798 = vst [vmem:[#allocation9] sm:$0xff] %v1797
        $region56: #{tpu_custom_call.1} parent=35 // pred_fallthru
          _
        // Predicated region
        $region57: #{tpu_custom_call.1} parent=35 // pred_check
          %p1799 = pneg %p141
        $region58: #{tpu_custom_call.1} parent=35 // pred_check_branch
          %1801 = sbr.rel (%p1799) target = $region60
        $region59: #{tpu_custom_call.1} parent=35 // pred_region
          %s1803 = ssub.s32 128, 128
          %1804 = vsyncadd [#allocation5], %s1803
          %s1805 = smul.addr %s24, 128
          %s1806 = scalar_lea.hbm %s4, %s1805
          %s1808 = sshll.u32 [#allocation9], 4
          %s1809 = int_to_ptr.vmem [resolvable:$true] %s1808
          %1811 = dma.vmem_to_hbm [thread:$0]  %s1809, 128, %s1806, [#allocation5]
        $region60: #{tpu_custom_call.1} parent=35 // pred_fallthru
          _
        // Predicated region
        $region61: #{tpu_custom_call.1} parent=35 // pred_check
          %p1812 = pneg %p141
        $region62: #{tpu_custom_call.1} parent=35 // pred_check_branch
          %1814 = sbr.rel (%p1812) target = $region64
        $region63: #{tpu_custom_call.1} parent=35 // pred_region
          %1815 = dma.done [#allocation5], 128
        $region64: #{tpu_custom_call.1} parent=35 // pred_fallthru
          _
      $region36: #{tpu_custom_call.1} parent=5 // pred_fallthru
        _
      %p1816 = scmp.le.s32.totalorder 2, %s15
      // Predicated region
      $region65: #{tpu_custom_call.1} parent=5 // pred_check
        %p1817 = pneg %p1816
      $region66: #{tpu_custom_call.1} parent=5 // pred_check_branch
        %1819 = sbr.rel (%p1817) target = $region68
      $region67: #{tpu_custom_call.1} parent=5 // pred_region
        %s1820 = ssub.s32 %s15, 2
      $region68: #{tpu_custom_call.1} parent=5 // pred_fallthru
        _
    $region6: #{tpu_custom_call.1} parent=1 // loop_footer
      %s19 = sadd.s32 1, %s15
    $region7: #{tpu_custom_call.1} parent=1 // loop_footer_branch
      %14 = sbr.rel target = $region3
    $region8: #{tpu_custom_call.1} parent=1 // loop_exit
      _
    %1821 = vsyncpa [#allocation4], 1
    %s1822 = scalar_lea.sflag [#allocation4], 1
    %1823 = vsyncpa %s1822, 1
    %1824 = vsyncpa [#allocation7], 1
    %1825 = vsyncpa [#allocation5], 1
    %s1826 = scalar_lea.sflag [#allocation5], 1
    %1827 = vsyncpa %s1826, 1

</llo_original>
